<compile_context>
chip_gen: v7x
topology: tpu7x:2x2x1
jax: 0.10.0
libtpu: 0.0.40
codegen_flags: <defaults>
</compile_context>

<pallas_src>
import jax
import jax.numpy as jnp
from jax.experimental import pallas as pl
from jax.experimental.pallas import tpu as pltpu

NZ = 1            # latent channels
NGF = 8           # base feature width
NC = 1            # output channels
K_UP = 4          # kernel of the 4 stride-2 transposed convs
K_LAST = 145      # kernel of the final stride-1 transposed conv
N_UP = 4          # number of stride-2 upsampling layers
N_PHASES = 2 ** N_UP   # 16 = total upsampling factor / polyphase count


# ----------------------------------------------------------------------------
# One-time parameter preparation (pure JAX): spectral norm + kernel layouts
# ----------------------------------------------------------------------------
def spectral_normalize(w, n_iter=64, eps=1e-12):
    """Spectral norm of a ConvTranspose1d weight (Cin, Cout, K); PyTorch uses dim=1."""
    # TODO(synk): PyTorch keeps persistent u/v power-iteration buffers; here the
    # iteration is converged at prep time (matches eval-mode forward up to
    # power-iteration convergence).
    wm = jnp.transpose(w, (1, 0, 2)).reshape(w.shape[1], -1)      # (Cout, Cin*K)
    u0 = jnp.full((wm.shape[0],), 1.0 / jnp.sqrt(wm.shape[0]), jnp.float32)

    def body(_, u):
        v = wm.T @ u
        v = v / (jnp.linalg.norm(v) + eps)
        u = wm @ v
        return u / (jnp.linalg.norm(u) + eps)

    u = jax.lax.fori_loop(0, n_iter, body, u0)
    v = wm.T @ u
    v = v / (jnp.linalg.norm(v) + eps)
    sigma = u @ (wm @ v)
    return w / sigma


def _build_wcat(w):
    """(Cin, Cout, 4) deconv weight -> (3*Cin, 2*Cout) fused-tap matrix.

    Row blocks multiply [x[j+1] | x[j] | x[j-1]]; column halves produce the
    even-parity (taps 1,3) and odd-parity (taps 0,2) outputs of the s=2 deconv.
    """
    cin, cout, _ = w.shape
    z = jnp.zeros((cin, cout), w.dtype)
    top = jnp.concatenate([z,          w[:, :, 0]], axis=1)   # coeff of x[j+1]
    mid = jnp.concatenate([w[:, :, 1], w[:, :, 2]], axis=1)   # coeff of x[j]
    bot = jnp.concatenate([w[:, :, 3], z],          axis=1)   # coeff of x[j-1]
    return jnp.concatenate([top, mid, bot], axis=0)


def _build_wbase(w5):
    """(NGF, 1, 145) final weight -> (N_PHASES*NGF, 145+N_PHASES-1) phase-Toeplitz.

    Row q*NGF+ci, column u holds W5[ci, 0, u-q]; with the polyphase activation
    x4[N_PHASES*m + q, ci] the whole k=145 deconv is one matmul + shifted adds.
    """
    cin, _, k = w5.shape
    u_len = k + N_PHASES - 1
    wk = w5[:, 0, :]                                          # (cin, k)
    q = jnp.arange(N_PHASES)[:, None, None]
    ci = jnp.arange(cin)[None, :, None]
    u = jnp.arange(u_len)[None, None, :]
    tap = u - q
    vals = jnp.where((tap >= 0) & (tap < k), wk[ci, jnp.clip(tap, 0, k - 1)], 0.0)
    return vals.reshape(N_PHASES * cin, u_len)                # (128, 160) for ngf=8


def prepare_params(ws_normalized):
    w1, w2, w3, w4, w5 = ws_normalized
    return (_build_wcat(w1), _build_wcat(w2), _build_wcat(w3),
            _build_wcat(w4), _build_wbase(w5))


# ----------------------------------------------------------------------------
# Fused generator kernel
# ----------------------------------------------------------------------------
def _shift_prev(b):
    """out[m] = b[m-1], zero row at m=0."""
    return jnp.concatenate(
        [jnp.zeros((1, b.shape[1]), jnp.float32), b[:-1, :]], axis=0)


def _shift_next(b):
    """out[m] = b[m+1], zero row at the end."""
    return jnp.concatenate(
        [b[1:, :], jnp.zeros((1, b.shape[1]), jnp.float32)], axis=0)


def _deconv_k4s2(blocks, wcat):
    """One ConvTranspose1d(k=4, s=2, p=1) layer in polyphase form.

    blocks: list of P arrays (L0, Cin); signal x[P*m + p] = blocks[p][m].
    wcat:   (3*Cin, 2*Cout) fused-tap weight.
    Returns 2*P arrays (L0, Cout) with y[2P*m + q] = out[q][m].
    """
    cin = wcat.shape[0] // 3
    cout = wcat.shape[1] // 2
    n_p = len(blocks)
    out = []
    for p in range(n_p):
        b = blocks[p]
        prev_b = blocks[p - 1] if p > 0 else _shift_prev(blocks[n_p - 1])
        next_b = blocks[p + 1] if p < n_p - 1 else _shift_next(blocks[0])
        if cin == 1:
            # VPU path: avoid the degenerate Cin=1 MXU matmul (broadcast MACs).
            eo = (next_b * wcat[0:1, :] + b * wcat[1:2, :] + prev_b * wcat[2:3, :])
        else:
            xcat = jnp.concatenate([next_b, b, prev_b], axis=1)   # (L0, 3*Cin)
            eo = jnp.dot(xcat, wcat, preferred_element_type=jnp.float32)
        out.append(eo[:, :cout])    # even output parity
        out.append(eo[:, cout:])    # odd output parity
    return out


def _generator_kernel(x_ref, w1_ref, w2_ref, w3_ref, w4_ref, wb_ref, o_ref):
    # x_ref: (1, L0, 1) one latent sample in NLC layout
    x = x_ref[0].astype(jnp.float32)                   # (L0, 1)

    blocks = [x]
    blocks = _deconv_k4s2(blocks, w1_ref[...])         # 2  x (L0, 64)
    blocks = _deconv_k4s2(blocks, w2_ref[...])         # 4  x (L0, 32)
    blocks = _deconv_k4s2(blocks, w3_ref[...])         # 8  x (L0, 16)
    blocks = _deconv_k4s2(blocks, w4_ref[...])         # 16 x (L0, 8)
    stride = len(blocks)                               # = N_PHASES = 16

    # Final ConvTranspose1d(ngf, 1, k=145, s=1, p=0) as one lane-dense matmul:
    # x4[stride*m + q, ci] = blocks[q][m, ci]  ->  xwide[m, q*ngf + ci]
    xwide = jnp.concatenate(blocks, axis=1)            # (L0, 128)
    z = jnp.dot(xwide, wb_ref[...], preferred_element_type=jnp.float32)  # (L0, 160)

    l0 = xwide.shape[0]
    u_len = z.shape[1]                                 # K_LAST + stride - 1
    l_out = o_ref.shape[2]                             # stride*L0 + K_LAST - 1
    acc = None
    for m in range(l0):                                # 8 shifted accumulate-adds
        left = stride * m
        right = l_out - u_len - left
        pieces = []
        if left > 0:
            pieces.append(jnp.zeros((1, left), jnp.float32))
        pieces.append(z[m:m + 1, :])
        if right > 0:
            pieces.append(jnp.zeros((1, right), jnp.float32))
        row = pieces[0] if len(pieces) == 1 else jnp.concatenate(pieces, axis=1)
        acc = row if acc is None else acc + row
    o_ref[0] = acc.astype(o_ref.dtype)                 # (1, L_out)


def generator_forward(x_ncl, prepped):
    """x_ncl: (B, 1, L0) latent in PyTorch NCL layout -> (B, 1, 16*L0 + 144)."""
    w1, w2, w3, w4, wb = prepped
    b, nz, l0 = x_ncl.shape
    assert nz == NZ
    l_out = N_PHASES * l0 + K_LAST - 1
    x_nlc = jnp.transpose(x_ncl, (0, 2, 1))            # (B, L0, 1)
    return pl.pallas_call(
        _generator_kernel,
        out_shape=jax.ShapeDtypeStruct((b, NC, l_out), x_ncl.dtype),
        grid=(b,),
        in_specs=[
            pl.BlockSpec((1, l0, 1), lambda i: (i, 0, 0)),
            pl.BlockSpec(w1.shape, lambda i: (0, 0)),
            pl.BlockSpec(w2.shape, lambda i: (0, 0)),
            pl.BlockSpec(w3.shape, lambda i: (0, 0)),
            pl.BlockSpec(w4.shape, lambda i: (0, 0)),
            pl.BlockSpec(wb.shape, lambda i: (0, 0)),
        ],
        out_specs=pl.BlockSpec((1, NC, l_out), lambda i: (i, 0, 0)),
        compiler_params=pltpu.CompilerParams(dimension_semantics=("parallel",)),
    )(x_nlc, w1, w2, w3, w4, wb)


# ----------------------------------------------------------------------------
# Pure-JAX reference (PyTorch ConvTranspose1d semantics, NCL layout)
# ----------------------------------------------------------------------------
def generator_reference(x_ncl, ws_normalized):
    strides = (2, 2, 2, 2, 1)
    pads = (1, 1, 1, 1, 0)
    h = x_ncl
    for w, s, p in zip(ws_normalized, strides, pads):
        k = w.shape[2]
        w_t = jnp.transpose(jnp.flip(w, axis=2), (1, 0, 2))    # (Cout, Cin, K)
        h = jax.lax.conv_general_dilated(
            h, w_t, window_strides=(1,), padding=[(k - 1 - p, k - 1 - p)],
            lhs_dilation=(s,), dimension_numbers=("NCH", "OIH", "NCH"))
    return h


# ----------------------------------------------------------------------------
# Deterministic parameter init + test
# ----------------------------------------------------------------------------
def init_params():
    shapes = [
        (NZ, NGF * 8, K_UP),
        (NGF * 8, NGF * 4, K_UP),
        (NGF * 4, NGF * 2, K_UP),
        (NGF * 2, NGF, K_UP),
        (NGF, NC, K_LAST),
    ]
    key = jax.random.PRNGKey(0)
    ws = []
    for s in shapes:
        key, sub = jax.random.split(key)
        ws.append(jax.random.normal(sub, s, jnp.float32) * 0.05)
    return ws


if __name__ == "__main__":
    B, L0 = 2, 8   # small latent: (batch=2, nz=1, seq=8) -> output length 272

    ws_raw = init_params()
    ws_n = [spectral_normalize(w) for w in ws_raw]   # SN as one-time weight prep
    prepped = prepare_params(ws_n)

    x = jax.random.normal(jax.random.PRNGKey(0), (B, NZ, L0), jnp.float32)

    out = jax.block_until_ready(generator_forward(x, prepped))
    ref = jax.block_until_ready(generator_reference(x, ws_n))

    assert out.shape == (B, NC, N_PHASES * L0 + K_LAST - 1), out.shape
    max_err = float(jnp.max(jnp.abs(out - ref)))
    assert jnp.allclose(out, ref, rtol=1e-3, atol=1e-3), (
        f"mismatch vs reference: max abs err {max_err}")
    print("KERNEL_OK")
</pallas_src>

<mosaic_0001>
module attributes {stable_mosaic.version = 11 : i64} {
  func.func @_generator_kernel(%arg0: i32, %arg1: memref<1x8x1xf32, #tpu.memory_space<vmem>>, %arg2: memref<3x128xf32, #tpu.memory_space<vmem>>, %arg3: memref<192x64xf32, #tpu.memory_space<vmem>>, %arg4: memref<96x32xf32, #tpu.memory_space<vmem>>, %arg5: memref<48x16xf32, #tpu.memory_space<vmem>>, %arg6: memref<128x160xf32, #tpu.memory_space<vmem>>, %arg7: memref<1x1x272xf32, #tpu.memory_space<vmem>>) attributes {dimension_semantics = [#tpu.dimension_semantics<parallel>], iteration_bounds = array<i64: 2>, scalar_prefetch = 0 : i64, scratch_operands = 0 : i64, tpu.core_type = #tpu.core_type<tc>, window_params = [{transform_indices = @transform_0, window_bounds = array<i64: 1, 8, 1>}, {pipeline_mode = #tpu.pipeline_mode<synchronous>, transform_indices = @transform_1, window_bounds = array<i64: 3, 128>}, {pipeline_mode = #tpu.pipeline_mode<synchronous>, transform_indices = @transform_2, window_bounds = array<i64: 192, 64>}, {pipeline_mode = #tpu.pipeline_mode<synchronous>, transform_indices = @transform_3, window_bounds = array<i64: 96, 32>}, {pipeline_mode = #tpu.pipeline_mode<synchronous>, transform_indices = @transform_4, window_bounds = array<i64: 48, 16>}, {pipeline_mode = #tpu.pipeline_mode<synchronous>, transform_indices = @transform_5, window_bounds = array<i64: 128, 160>}, {transform_indices = @transform_6, window_bounds = array<i64: 1, 1, 272>}]} {
    %c0 = arith.constant 0 : index
    %c0_0 = arith.constant 0 : index
    %c0_1 = arith.constant 0 : index
    %0 = vector.load %arg1[%c0, %c0_0, %c0_1] : memref<1x8x1xf32, #tpu.memory_space<vmem>>, vector<1x8x1xf32>
    %1 = vector.shape_cast %0 : vector<1x8x1xf32> to vector<8x1xf32>
    %c0_2 = arith.constant 0 : index
    %c0_3 = arith.constant 0 : index
    %2 = vector.load %arg2[%c0_2, %c0_3] : memref<3x128xf32, #tpu.memory_space<vmem>>, vector<3x128xf32>
    %cst = arith.constant 0.000000e+00 : f32
    %3 = vector.broadcast %cst : f32 to vector<1x1xf32>
    %4 = vector.extract_strided_slice %1 {offsets = [0, 0], sizes = [7, 1], strides = [1, 1]} : vector<8x1xf32> to vector<7x1xf32>
    %5 = tpu.concatenate %3, %4 in 0 : vector<1x1xf32>, vector<7x1xf32> -> vector<8x1xf32>
    %6 = vector.extract_strided_slice %1 {offsets = [1, 0], sizes = [7, 1], strides = [1, 1]} : vector<8x1xf32> to vector<7x1xf32>
    %cst_4 = arith.constant 0.000000e+00 : f32
    %7 = vector.broadcast %cst_4 : f32 to vector<1x1xf32>
    %8 = tpu.concatenate %6, %7 in 0 : vector<7x1xf32>, vector<1x1xf32> -> vector<8x1xf32>
    %9 = vector.extract_strided_slice %2 {offsets = [0, 0], sizes = [1, 128], strides = [1, 1]} : vector<3x128xf32> to vector<1x128xf32>
    %10 = vector.broadcast %8 : vector<8x1xf32> to vector<8x128xf32>
    %11 = vector.broadcast %9 : vector<1x128xf32> to vector<8x128xf32>
    %12 = arith.mulf %10, %11 : vector<8x128xf32>
    %13 = vector.extract_strided_slice %2 {offsets = [1, 0], sizes = [1, 128], strides = [1, 1]} : vector<3x128xf32> to vector<1x128xf32>
    %14 = vector.broadcast %1 : vector<8x1xf32> to vector<8x128xf32>
    %15 = vector.broadcast %13 : vector<1x128xf32> to vector<8x128xf32>
    %16 = arith.mulf %14, %15 : vector<8x128xf32>
    %17 = arith.addf %12, %16 : vector<8x128xf32>
    %18 = vector.extract_strided_slice %2 {offsets = [2, 0], sizes = [1, 128], strides = [1, 1]} : vector<3x128xf32> to vector<1x128xf32>
    %19 = vector.broadcast %5 : vector<8x1xf32> to vector<8x128xf32>
    %20 = vector.broadcast %18 : vector<1x128xf32> to vector<8x128xf32>
    %21 = arith.mulf %19, %20 : vector<8x128xf32>
    %22 = arith.addf %17, %21 : vector<8x128xf32>
    %23 = vector.extract_strided_slice %22 {offsets = [0, 0], sizes = [8, 64], strides = [1, 1]} : vector<8x128xf32> to vector<8x64xf32>
    %24 = vector.extract_strided_slice %22 {offsets = [0, 64], sizes = [8, 64], strides = [1, 1]} : vector<8x128xf32> to vector<8x64xf32>
    %c0_5 = arith.constant 0 : index
    %c0_6 = arith.constant 0 : index
    %25 = vector.load %arg3[%c0_5, %c0_6] : memref<192x64xf32, #tpu.memory_space<vmem>>, vector<192x64xf32>
    %cst_7 = arith.constant 0.000000e+00 : f32
    %26 = vector.broadcast %cst_7 : f32 to vector<1x64xf32>
    %27 = vector.extract_strided_slice %24 {offsets = [0, 0], sizes = [7, 64], strides = [1, 1]} : vector<8x64xf32> to vector<7x64xf32>
    %28 = tpu.concatenate %26, %27 in 0 : vector<1x64xf32>, vector<7x64xf32> -> vector<8x64xf32>
    %29 = tpu.concatenate %24, %23, %28 in 1 : vector<8x64xf32>, vector<8x64xf32>, vector<8x64xf32> -> vector<8x192xf32>
    %cst_8 = arith.constant dense<0.000000e+00> : vector<8x64xf32>
    %30 = tpu.matmul %29, %25, %cst_8 {dimension_numbers = #tpu.dot_dimension_numbers<[1], [0], [0], [1], [0, 0, 1, 1], [], []>} : vector<8x192xf32>, vector<192x64xf32>, vector<8x64xf32> -> vector<8x64xf32>
    %31 = vector.extract_strided_slice %30 {offsets = [0, 0], sizes = [8, 32], strides = [1, 1]} : vector<8x64xf32> to vector<8x32xf32>
    %32 = vector.extract_strided_slice %30 {offsets = [0, 32], sizes = [8, 32], strides = [1, 1]} : vector<8x64xf32> to vector<8x32xf32>
    %33 = vector.extract_strided_slice %23 {offsets = [1, 0], sizes = [7, 64], strides = [1, 1]} : vector<8x64xf32> to vector<7x64xf32>
    %cst_9 = arith.constant 0.000000e+00 : f32
    %34 = vector.broadcast %cst_9 : f32 to vector<1x64xf32>
    %35 = tpu.concatenate %33, %34 in 0 : vector<7x64xf32>, vector<1x64xf32> -> vector<8x64xf32>
    %36 = tpu.concatenate %35, %24, %23 in 1 : vector<8x64xf32>, vector<8x64xf32>, vector<8x64xf32> -> vector<8x192xf32>
    %cst_10 = arith.constant dense<0.000000e+00> : vector<8x64xf32>
    %37 = tpu.matmul %36, %25, %cst_10 {dimension_numbers = #tpu.dot_dimension_numbers<[1], [0], [0], [1], [0, 0, 1, 1], [], []>} : vector<8x192xf32>, vector<192x64xf32>, vector<8x64xf32> -> vector<8x64xf32>
    %38 = vector.extract_strided_slice %37 {offsets = [0, 0], sizes = [8, 32], strides = [1, 1]} : vector<8x64xf32> to vector<8x32xf32>
    %39 = vector.extract_strided_slice %37 {offsets = [0, 32], sizes = [8, 32], strides = [1, 1]} : vector<8x64xf32> to vector<8x32xf32>
    %c0_11 = arith.constant 0 : index
    %c0_12 = arith.constant 0 : index
    %40 = vector.load %arg4[%c0_11, %c0_12] : memref<96x32xf32, #tpu.memory_space<vmem>>, vector<96x32xf32>
    %cst_13 = arith.constant 0.000000e+00 : f32
    %41 = vector.broadcast %cst_13 : f32 to vector<1x32xf32>
    %42 = vector.extract_strided_slice %39 {offsets = [0, 0], sizes = [7, 32], strides = [1, 1]} : vector<8x32xf32> to vector<7x32xf32>
    %43 = tpu.concatenate %41, %42 in 0 : vector<1x32xf32>, vector<7x32xf32> -> vector<8x32xf32>
    %44 = tpu.concatenate %32, %31, %43 in 1 : vector<8x32xf32>, vector<8x32xf32>, vector<8x32xf32> -> vector<8x96xf32>
    %cst_14 = arith.constant dense<0.000000e+00> : vector<8x32xf32>
    %45 = tpu.matmul %44, %40, %cst_14 {dimension_numbers = #tpu.dot_dimension_numbers<[1], [0], [0], [1], [0, 0, 1, 1], [], []>} : vector<8x96xf32>, vector<96x32xf32>, vector<8x32xf32> -> vector<8x32xf32>
    %46 = vector.extract_strided_slice %45 {offsets = [0, 0], sizes = [8, 16], strides = [1, 1]} : vector<8x32xf32> to vector<8x16xf32>
    %47 = vector.extract_strided_slice %45 {offsets = [0, 16], sizes = [8, 16], strides = [1, 1]} : vector<8x32xf32> to vector<8x16xf32>
    %48 = tpu.concatenate %38, %32, %31 in 1 : vector<8x32xf32>, vector<8x32xf32>, vector<8x32xf32> -> vector<8x96xf32>
    %cst_15 = arith.constant dense<0.000000e+00> : vector<8x32xf32>
    %49 = tpu.matmul %48, %40, %cst_15 {dimension_numbers = #tpu.dot_dimension_numbers<[1], [0], [0], [1], [0, 0, 1, 1], [], []>} : vector<8x96xf32>, vector<96x32xf32>, vector<8x32xf32> -> vector<8x32xf32>
    %50 = vector.extract_strided_slice %49 {offsets = [0, 0], sizes = [8, 16], strides = [1, 1]} : vector<8x32xf32> to vector<8x16xf32>
    %51 = vector.extract_strided_slice %49 {offsets = [0, 16], sizes = [8, 16], strides = [1, 1]} : vector<8x32xf32> to vector<8x16xf32>
    %52 = tpu.concatenate %39, %38, %32 in 1 : vector<8x32xf32>, vector<8x32xf32>, vector<8x32xf32> -> vector<8x96xf32>
    %cst_16 = arith.constant dense<0.000000e+00> : vector<8x32xf32>
    %53 = tpu.matmul %52, %40, %cst_16 {dimension_numbers = #tpu.dot_dimension_numbers<[1], [0], [0], [1], [0, 0, 1, 1], [], []>} : vector<8x96xf32>, vector<96x32xf32>, vector<8x32xf32> -> vector<8x32xf32>
    %54 = vector.extract_strided_slice %53 {offsets = [0, 0], sizes = [8, 16], strides = [1, 1]} : vector<8x32xf32> to vector<8x16xf32>
    %55 = vector.extract_strided_slice %53 {offsets = [0, 16], sizes = [8, 16], strides = [1, 1]} : vector<8x32xf32> to vector<8x16xf32>
    %56 = vector.extract_strided_slice %31 {offsets = [1, 0], sizes = [7, 32], strides = [1, 1]} : vector<8x32xf32> to vector<7x32xf32>
    %cst_17 = arith.constant 0.000000e+00 : f32
    %57 = vector.broadcast %cst_17 : f32 to vector<1x32xf32>
    %58 = tpu.concatenate %56, %57 in 0 : vector<7x32xf32>, vector<1x32xf32> -> vector<8x32xf32>
    %59 = tpu.concatenate %58, %39, %38 in 1 : vector<8x32xf32>, vector<8x32xf32>, vector<8x32xf32> -> vector<8x96xf32>
    %cst_18 = arith.constant dense<0.000000e+00> : vector<8x32xf32>
    %60 = tpu.matmul %59, %40, %cst_18 {dimension_numbers = #tpu.dot_dimension_numbers<[1], [0], [0], [1], [0, 0, 1, 1], [], []>} : vector<8x96xf32>, vector<96x32xf32>, vector<8x32xf32> -> vector<8x32xf32>
    %61 = vector.extract_strided_slice %60 {offsets = [0, 0], sizes = [8, 16], strides = [1, 1]} : vector<8x32xf32> to vector<8x16xf32>
    %62 = vector.extract_strided_slice %60 {offsets = [0, 16], sizes = [8, 16], strides = [1, 1]} : vector<8x32xf32> to vector<8x16xf32>
    %c0_19 = arith.constant 0 : index
    %c0_20 = arith.constant 0 : index
    %63 = vector.load %arg5[%c0_19, %c0_20] : memref<48x16xf32, #tpu.memory_space<vmem>>, vector<48x16xf32>
    %cst_21 = arith.constant 0.000000e+00 : f32
    %64 = vector.broadcast %cst_21 : f32 to vector<1x16xf32>
    %65 = vector.extract_strided_slice %62 {offsets = [0, 0], sizes = [7, 16], strides = [1, 1]} : vector<8x16xf32> to vector<7x16xf32>
    %66 = tpu.concatenate %64, %65 in 0 : vector<1x16xf32>, vector<7x16xf32> -> vector<8x16xf32>
    %67 = tpu.concatenate %47, %46, %66 in 1 : vector<8x16xf32>, vector<8x16xf32>, vector<8x16xf32> -> vector<8x48xf32>
    %cst_22 = arith.constant dense<0.000000e+00> : vector<8x16xf32>
    %68 = tpu.matmul %67, %63, %cst_22 {dimension_numbers = #tpu.dot_dimension_numbers<[1], [0], [0], [1], [0, 0, 1, 1], [], []>} : vector<8x48xf32>, vector<48x16xf32>, vector<8x16xf32> -> vector<8x16xf32>
    %69 = vector.extract_strided_slice %68 {offsets = [0, 0], sizes = [8, 8], strides = [1, 1]} : vector<8x16xf32> to vector<8x8xf32>
    %70 = vector.extract_strided_slice %68 {offsets = [0, 8], sizes = [8, 8], strides = [1, 1]} : vector<8x16xf32> to vector<8x8xf32>
    %71 = tpu.concatenate %50, %47, %46 in 1 : vector<8x16xf32>, vector<8x16xf32>, vector<8x16xf32> -> vector<8x48xf32>
    %cst_23 = arith.constant dense<0.000000e+00> : vector<8x16xf32>
    %72 = tpu.matmul %71, %63, %cst_23 {dimension_numbers = #tpu.dot_dimension_numbers<[1], [0], [0], [1], [0, 0, 1, 1], [], []>} : vector<8x48xf32>, vector<48x16xf32>, vector<8x16xf32> -> vector<8x16xf32>
    %73 = vector.extract_strided_slice %72 {offsets = [0, 0], sizes = [8, 8], strides = [1, 1]} : vector<8x16xf32> to vector<8x8xf32>
    %74 = vector.extract_strided_slice %72 {offsets = [0, 8], sizes = [8, 8], strides = [1, 1]} : vector<8x16xf32> to vector<8x8xf32>
    %75 = tpu.concatenate %51, %50, %47 in 1 : vector<8x16xf32>, vector<8x16xf32>, vector<8x16xf32> -> vector<8x48xf32>
    %cst_24 = arith.constant dense<0.000000e+00> : vector<8x16xf32>
    %76 = tpu.matmul %75, %63, %cst_24 {dimension_numbers = #tpu.dot_dimension_numbers<[1], [0], [0], [1], [0, 0, 1, 1], [], []>} : vector<8x48xf32>, vector<48x16xf32>, vector<8x16xf32> -> vector<8x16xf32>
    %77 = vector.extract_strided_slice %76 {offsets = [0, 0], sizes = [8, 8], strides = [1, 1]} : vector<8x16xf32> to vector<8x8xf32>
    %78 = vector.extract_strided_slice %76 {offsets = [0, 8], sizes = [8, 8], strides = [1, 1]} : vector<8x16xf32> to vector<8x8xf32>
    %79 = tpu.concatenate %54, %51, %50 in 1 : vector<8x16xf32>, vector<8x16xf32>, vector<8x16xf32> -> vector<8x48xf32>
    %cst_25 = arith.constant dense<0.000000e+00> : vector<8x16xf32>
    %80 = tpu.matmul %79, %63, %cst_25 {dimension_numbers = #tpu.dot_dimension_numbers<[1], [0], [0], [1], [0, 0, 1, 1], [], []>} : vector<8x48xf32>, vector<48x16xf32>, vector<8x16xf32> -> vector<8x16xf32>
    %81 = vector.extract_strided_slice %80 {offsets = [0, 0], sizes = [8, 8], strides = [1, 1]} : vector<8x16xf32> to vector<8x8xf32>
    %82 = vector.extract_strided_slice %80 {offsets = [0, 8], sizes = [8, 8], strides = [1, 1]} : vector<8x16xf32> to vector<8x8xf32>
    %83 = tpu.concatenate %55, %54, %51 in 1 : vector<8x16xf32>, vector<8x16xf32>, vector<8x16xf32> -> vector<8x48xf32>
    %cst_26 = arith.constant dense<0.000000e+00> : vector<8x16xf32>
    %84 = tpu.matmul %83, %63, %cst_26 {dimension_numbers = #tpu.dot_dimension_numbers<[1], [0], [0], [1], [0, 0, 1, 1], [], []>} : vector<8x48xf32>, vector<48x16xf32>, vector<8x16xf32> -> vector<8x16xf32>
    %85 = vector.extract_strided_slice %84 {offsets = [0, 0], sizes = [8, 8], strides = [1, 1]} : vector<8x16xf32> to vector<8x8xf32>
    %86 = vector.extract_strided_slice %84 {offsets = [0, 8], sizes = [8, 8], strides = [1, 1]} : vector<8x16xf32> to vector<8x8xf32>
    %87 = tpu.concatenate %61, %55, %54 in 1 : vector<8x16xf32>, vector<8x16xf32>, vector<8x16xf32> -> vector<8x48xf32>
    %cst_27 = arith.constant dense<0.000000e+00> : vector<8x16xf32>
    %88 = tpu.matmul %87, %63, %cst_27 {dimension_numbers = #tpu.dot_dimension_numbers<[1], [0], [0], [1], [0, 0, 1, 1], [], []>} : vector<8x48xf32>, vector<48x16xf32>, vector<8x16xf32> -> vector<8x16xf32>
    %89 = vector.extract_strided_slice %88 {offsets = [0, 0], sizes = [8, 8], strides = [1, 1]} : vector<8x16xf32> to vector<8x8xf32>
    %90 = vector.extract_strided_slice %88 {offsets = [0, 8], sizes = [8, 8], strides = [1, 1]} : vector<8x16xf32> to vector<8x8xf32>
    %91 = tpu.concatenate %62, %61, %55 in 1 : vector<8x16xf32>, vector<8x16xf32>, vector<8x16xf32> -> vector<8x48xf32>
    %cst_28 = arith.constant dense<0.000000e+00> : vector<8x16xf32>
    %92 = tpu.matmul %91, %63, %cst_28 {dimension_numbers = #tpu.dot_dimension_numbers<[1], [0], [0], [1], [0, 0, 1, 1], [], []>} : vector<8x48xf32>, vector<48x16xf32>, vector<8x16xf32> -> vector<8x16xf32>
    %93 = vector.extract_strided_slice %92 {offsets = [0, 0], sizes = [8, 8], strides = [1, 1]} : vector<8x16xf32> to vector<8x8xf32>
    %94 = vector.extract_strided_slice %92 {offsets = [0, 8], sizes = [8, 8], strides = [1, 1]} : vector<8x16xf32> to vector<8x8xf32>
    %95 = vector.extract_strided_slice %46 {offsets = [1, 0], sizes = [7, 16], strides = [1, 1]} : vector<8x16xf32> to vector<7x16xf32>
    %cst_29 = arith.constant 0.000000e+00 : f32
    %96 = vector.broadcast %cst_29 : f32 to vector<1x16xf32>
    %97 = tpu.concatenate %95, %96 in 0 : vector<7x16xf32>, vector<1x16xf32> -> vector<8x16xf32>
    %98 = tpu.concatenate %97, %62, %61 in 1 : vector<8x16xf32>, vector<8x16xf32>, vector<8x16xf32> -> vector<8x48xf32>
    %cst_30 = arith.constant dense<0.000000e+00> : vector<8x16xf32>
    %99 = tpu.matmul %98, %63, %cst_30 {dimension_numbers = #tpu.dot_dimension_numbers<[1], [0], [0], [1], [0, 0, 1, 1], [], []>} : vector<8x48xf32>, vector<48x16xf32>, vector<8x16xf32> -> vector<8x16xf32>
    %100 = vector.extract_strided_slice %99 {offsets = [0, 0], sizes = [8, 8], strides = [1, 1]} : vector<8x16xf32> to vector<8x8xf32>
    %101 = vector.extract_strided_slice %99 {offsets = [0, 8], sizes = [8, 8], strides = [1, 1]} : vector<8x16xf32> to vector<8x8xf32>
    %102 = tpu.concatenate %69, %70, %73, %74, %77, %78, %81, %82, %85, %86, %89, %90, %93, %94, %100, %101 in 1 : vector<8x8xf32>, vector<8x8xf32>, vector<8x8xf32>, vector<8x8xf32>, vector<8x8xf32>, vector<8x8xf32>, vector<8x8xf32>, vector<8x8xf32>, vector<8x8xf32>, vector<8x8xf32>, vector<8x8xf32>, vector<8x8xf32>, vector<8x8xf32>, vector<8x8xf32>, vector<8x8xf32>, vector<8x8xf32> -> vector<8x128xf32>
    %c0_31 = arith.constant 0 : index
    %c0_32 = arith.constant 0 : index
    %103 = vector.load %arg6[%c0_31, %c0_32] : memref<128x160xf32, #tpu.memory_space<vmem>>, vector<128x160xf32>
    %cst_33 = arith.constant dense<0.000000e+00> : vector<8x160xf32>
    %104 = tpu.matmul %102, %103, %cst_33 {dimension_numbers = #tpu.dot_dimension_numbers<[1], [0], [0], [1], [0, 0, 1, 1], [], []>} : vector<8x128xf32>, vector<128x160xf32>, vector<8x160xf32> -> vector<8x160xf32>
    %105 = vector.extract_strided_slice %104 {offsets = [0, 0], sizes = [1, 160], strides = [1, 1]} : vector<8x160xf32> to vector<1x160xf32>
    %cst_34 = arith.constant 0.000000e+00 : f32
    %106 = vector.broadcast %cst_34 : f32 to vector<1x112xf32>
    %107 = tpu.concatenate %105, %106 in 1 : vector<1x160xf32>, vector<1x112xf32> -> vector<1x272xf32>
    %cst_35 = arith.constant 0.000000e+00 : f32
    %108 = vector.broadcast %cst_35 : f32 to vector<1x16xf32>
    %109 = vector.extract_strided_slice %104 {offsets = [1, 0], sizes = [1, 160], strides = [1, 1]} : vector<8x160xf32> to vector<1x160xf32>
    %cst_36 = arith.constant 0.000000e+00 : f32
    %110 = vector.broadcast %cst_36 : f32 to vector<1x96xf32>
    %111 = tpu.concatenate %108, %109, %110 in 1 : vector<1x16xf32>, vector<1x160xf32>, vector<1x96xf32> -> vector<1x272xf32>
    %112 = arith.addf %107, %111 : vector<1x272xf32>
    %cst_37 = arith.constant 0.000000e+00 : f32
    %113 = vector.broadcast %cst_37 : f32 to vector<1x32xf32>
    %114 = vector.extract_strided_slice %104 {offsets = [2, 0], sizes = [1, 160], strides = [1, 1]} : vector<8x160xf32> to vector<1x160xf32>
    %cst_38 = arith.constant 0.000000e+00 : f32
    %115 = vector.broadcast %cst_38 : f32 to vector<1x80xf32>
    %116 = tpu.concatenate %113, %114, %115 in 1 : vector<1x32xf32>, vector<1x160xf32>, vector<1x80xf32> -> vector<1x272xf32>
    %117 = arith.addf %112, %116 : vector<1x272xf32>
    %cst_39 = arith.constant 0.000000e+00 : f32
    %118 = vector.broadcast %cst_39 : f32 to vector<1x48xf32>
    %119 = vector.extract_strided_slice %104 {offsets = [3, 0], sizes = [1, 160], strides = [1, 1]} : vector<8x160xf32> to vector<1x160xf32>
    %cst_40 = arith.constant 0.000000e+00 : f32
    %120 = vector.broadcast %cst_40 : f32 to vector<1x64xf32>
    %121 = tpu.concatenate %118, %119, %120 in 1 : vector<1x48xf32>, vector<1x160xf32>, vector<1x64xf32> -> vector<1x272xf32>
    %122 = arith.addf %117, %121 : vector<1x272xf32>
    %cst_41 = arith.constant 0.000000e+00 : f32
    %123 = vector.broadcast %cst_41 : f32 to vector<1x64xf32>
    %124 = vector.extract_strided_slice %104 {offsets = [4, 0], sizes = [1, 160], strides = [1, 1]} : vector<8x160xf32> to vector<1x160xf32>
    %cst_42 = arith.constant 0.000000e+00 : f32
    %125 = vector.broadcast %cst_42 : f32 to vector<1x48xf32>
    %126 = tpu.concatenate %123, %124, %125 in 1 : vector<1x64xf32>, vector<1x160xf32>, vector<1x48xf32> -> vector<1x272xf32>
    %127 = arith.addf %122, %126 : vector<1x272xf32>
    %cst_43 = arith.constant 0.000000e+00 : f32
    %128 = vector.broadcast %cst_43 : f32 to vector<1x80xf32>
    %129 = vector.extract_strided_slice %104 {offsets = [5, 0], sizes = [1, 160], strides = [1, 1]} : vector<8x160xf32> to vector<1x160xf32>
    %cst_44 = arith.constant 0.000000e+00 : f32
    %130 = vector.broadcast %cst_44 : f32 to vector<1x32xf32>
    %131 = tpu.concatenate %128, %129, %130 in 1 : vector<1x80xf32>, vector<1x160xf32>, vector<1x32xf32> -> vector<1x272xf32>
    %132 = arith.addf %127, %131 : vector<1x272xf32>
    %cst_45 = arith.constant 0.000000e+00 : f32
    %133 = vector.broadcast %cst_45 : f32 to vector<1x96xf32>
    %134 = vector.extract_strided_slice %104 {offsets = [6, 0], sizes = [1, 160], strides = [1, 1]} : vector<8x160xf32> to vector<1x160xf32>
    %cst_46 = arith.constant 0.000000e+00 : f32
    %135 = vector.broadcast %cst_46 : f32 to vector<1x16xf32>
    %136 = tpu.concatenate %133, %134, %135 in 1 : vector<1x96xf32>, vector<1x160xf32>, vector<1x16xf32> -> vector<1x272xf32>
    %137 = arith.addf %132, %136 : vector<1x272xf32>
    %cst_47 = arith.constant 0.000000e+00 : f32
    %138 = vector.broadcast %cst_47 : f32 to vector<1x112xf32>
    %139 = vector.extract_strided_slice %104 {offsets = [7, 0], sizes = [1, 160], strides = [1, 1]} : vector<8x160xf32> to vector<1x160xf32>
    %140 = tpu.concatenate %138, %139 in 1 : vector<1x112xf32>, vector<1x160xf32> -> vector<1x272xf32>
    %141 = arith.addf %137, %140 : vector<1x272xf32>
    %c0_48 = arith.constant 0 : index
    %c0_49 = arith.constant 0 : index
    %c0_50 = arith.constant 0 : index
    %142 = vector.load %arg7[%c0_48, %c0_49, %c0_50] : memref<1x1x272xf32, #tpu.memory_space<vmem>>, vector<1x1x272xf32>
    %143 = vector.shape_cast %142 : vector<1x1x272xf32> to vector<1x272xf32>
    %144 = vector.shape_cast %141 : vector<1x272xf32> to vector<1x1x272xf32>
    tpu.vector_store %arg7[%c0_48, %c0_49, %c0_50], %144 {strides = array<i32>} : memref<1x1x272xf32, #tpu.memory_space<vmem>>, vector<1x1x272xf32>,
    return
  }
  func.func @transform_0(%arg0: i32) -> (i32, i32, i32) {
    %c0_i32 = arith.constant 0 : i32
    %c0_i32_0 = arith.constant 0 : i32
    %c0_i32_1 = arith.constant 0 : i32
    return %arg0, %c0_i32, %c0_i32_0 : i32, i32, i32
  }
  func.func @transform_1(%arg0: i32) -> (i32, i32) {
    %c0_i32 = arith.constant 0 : i32
    %c0_i32_0 = arith.constant 0 : i32
    %c0_i32_1 = arith.constant 0 : i32
    return %c0_i32, %c0_i32_0 : i32, i32
  }
  func.func @transform_2(%arg0: i32) -> (i32, i32) {
    %c0_i32 = arith.constant 0 : i32
    %c0_i32_0 = arith.constant 0 : i32
    %c0_i32_1 = arith.constant 0 : i32
    return %c0_i32, %c0_i32_0 : i32, i32
  }
  func.func @transform_3(%arg0: i32) -> (i32, i32) {
    %c0_i32 = arith.constant 0 : i32
    %c0_i32_0 = arith.constant 0 : i32
    %c0_i32_1 = arith.constant 0 : i32
    return %c0_i32, %c0_i32_0 : i32, i32
  }
  func.func @transform_4(%arg0: i32) -> (i32, i32) {
    %c0_i32 = arith.constant 0 : i32
    %c0_i32_0 = arith.constant 0 : i32
    %c0_i32_1 = arith.constant 0 : i32
    return %c0_i32, %c0_i32_0 : i32, i32
  }
  func.func @transform_5(%arg0: i32) -> (i32, i32) {
    %c0_i32 = arith.constant 0 : i32
    %c0_i32_0 = arith.constant 0 : i32
    %c0_i32_1 = arith.constant 0 : i32
    return %c0_i32, %c0_i32_0 : i32, i32
  }
  func.func @transform_6(%arg0: i32) -> (i32, i32, i32) {
    %c0_i32 = arith.constant 0 : i32
    %c0_i32_0 = arith.constant 0 : i32
    %c0_i32_1 = arith.constant 0 : i32
    return %arg0, %c0_i32, %c0_i32_0 : i32, i32, i32
  }
}

</mosaic_0001>

<llo_original>
// kernel: tpu_custom_call.1
$region0: #{tpu_custom_call.1}
  #allocation0 [shape = 'u32[]', space=smem, size = 0x4, offset = 0x4, fixed_abs, tag = 'smem constant byte address 0x4 - core index']
  #allocation1 [shape = 'u32[144,128]{1,0:T(1,128)}', space=vmem, size = 0x12000, scoped, tag = 'internal scratch']
  %s0 = inlined_call_operand.vmem [shape: f32[2,8,1], index: 0, kind: input, shape index: {}]
  %s1 = inlined_call_operand.vmem [shape: f32[3,128], index: 1, kind: input, shape index: {}]
  %s2 = inlined_call_operand.vmem [shape: f32[192,64], index: 2, kind: input, shape index: {}]
  %s3 = inlined_call_operand.vmem [shape: f32[96,32], index: 3, kind: input, shape index: {}]
  %s4 = inlined_call_operand.vmem [shape: f32[48,16], index: 4, kind: input, shape index: {}]
  %s5 = inlined_call_operand.vmem [shape: f32[128,160], index: 5, kind: input, shape index: {}]
  %s6 = inlined_call_operand.hbm [shape: f32[2,1,272], index: 6, kind: output, shape index: {}]
  %s7 = sld [smem:[#allocation0]]
  $region57: #{tpu_custom_call.1} parent=0
    _
  %s9 = ssub.s32 1, %s7
  %s10 = scalar_select 0, %s9, %s7
  $region1: #{tpu_custom_call.1} parent=0
    #allocation2 [shape = 'u8[3072]{0}', space=vmem, size = 0xc00, scoped, tag = 'output window, operand 0']
    #allocation3 [shape = 's32[2]{0}', space=sflag, size = 0x8, scoped, tag = 'scoped memory for tpu_custom_call.1']
    %11 = vsyncpa [#allocation3], 0
    %s12 = scalar_lea.sflag [#allocation3], 1
    %13 = vsyncpa %s12, 0
    loop: start=0, step=1, limit=4
    $region2: #{tpu_custom_call.1} parent=1 // loop_pre_header
      _
    $region3: #{tpu_custom_call.1} parent=1 // loop_header
      %s15 = sphi 0, %s19
      %p16 = scmp.ge.s32.totalorder %s15, 4
      %s25 = sphi 0, %s27
      %s28 = sphi 0, %s25
      %s29 = sphi 0, %s28
      %s45 = sphi 0, %s29
      %s49 = sphi 0, %s49
      %s51 = sphi 0, %s49
      %s52 = sphi 0, %s51
      %s66 = sphi 0, %s52
      %s70 = sphi 0, %s70
      %s72 = sphi 0, %s70
      %s73 = sphi 0, %s72
      %s87 = sphi 0, %s73
      %s91 = sphi 0, %s91
      %s93 = sphi 0, %s91
      %s94 = sphi 0, %s93
      %s108 = sphi 0, %s94
      %s112 = sphi 0, %s112
      %s114 = sphi 0, %s112
      %s115 = sphi 0, %s114
      %s129 = sphi 0, %s115
      %s133 = sphi 0, %s133
      %s135 = sphi 0, %s133
      %s136 = sphi 0, %s135
      %s150 = sphi 0, %s136
      %s156 = sphi 0, %s158
      %s159 = sphi 0, %s156
      %s160 = sphi 0, %s159
      %s176 = sphi 0, %s160
    $region4: #{tpu_custom_call.1} parent=1 // loop_header_branch
      %18 = sbr.rel (%p16) target = $region8
    $region5: #{tpu_custom_call.1} parent=1 // loop_body
      %s20 = ssub.s32 %s15, 1
      %s21 = ssub.s32 %s15, 2
      %s22 = sadd.s32 %s15, 1
      %s23 = ssub.s32 %s15, %s22
      %p24 = scmp.eq.s32.totalorder %s23, 0
      %s26 = sadd.s32 %s25, 1
      %s27 = scalar_select %p24, %s25, %s26
      %p30 = pneg %p24
      %p31 = scmp.eq.s32.totalorder %s15, 1
      %p32 = por %p30, %p31
      %p33 = scmp.ne.s32.totalorder %s25, %s28
      %p34 = scmp.eq.s32.totalorder %s15, 0
      %p35 = por %p33, %p34
      %p36 = scmp.ne.s32.totalorder %s25, %s28
      %p37 = scmp.eq.s32.totalorder %s20, 1
      %p38 = por %p36, %p37
      %p39 = scmp.ne.s32.totalorder %s28, %s29
      %p40 = scmp.eq.s32.totalorder %s20, 0
      %p41 = por %p39, %p40
      %p42 = scmp.ne.s32.totalorder %s28, %s29
      %p43 = scmp.eq.s32.totalorder %s21, 1
      %p44 = por %p42, %p43
      %p46 = scmp.ne.s32.totalorder %s29, %s45
      %p47 = scmp.eq.s32.totalorder %s21, 0
      %p48 = por %p46, %p47
      %s50 = sadd.s32 %s49, 1
      %p53 = scmp.eq.s32.totalorder %s15, 1
      %p54 = scmp.ne.s32.totalorder %s49, %s51
      %p55 = scmp.eq.s32.totalorder %s15, 0
      %p56 = por %p54, %p55
      %p57 = scmp.ne.s32.totalorder %s49, %s51
      %p58 = scmp.eq.s32.totalorder %s20, 1
      %p59 = por %p57, %p58
      %p60 = scmp.ne.s32.totalorder %s51, %s52
      %p61 = scmp.eq.s32.totalorder %s20, 0
      %p62 = por %p60, %p61
      %p63 = scmp.ne.s32.totalorder %s51, %s52
      %p64 = scmp.eq.s32.totalorder %s21, 1
      %p65 = por %p63, %p64
      %p67 = scmp.ne.s32.totalorder %s52, %s66
      %p68 = scmp.eq.s32.totalorder %s21, 0
      %p69 = por %p67, %p68
      %s71 = sadd.s32 %s70, 1
      %p74 = scmp.eq.s32.totalorder %s15, 1
      %p75 = scmp.ne.s32.totalorder %s70, %s72
      %p76 = scmp.eq.s32.totalorder %s15, 0
      %p77 = por %p75, %p76
      %p78 = scmp.ne.s32.totalorder %s70, %s72
      %p79 = scmp.eq.s32.totalorder %s20, 1
      %p80 = por %p78, %p79
      %p81 = scmp.ne.s32.totalorder %s72, %s73
      %p82 = scmp.eq.s32.totalorder %s20, 0
      %p83 = por %p81, %p82
      %p84 = scmp.ne.s32.totalorder %s72, %s73
      %p85 = scmp.eq.s32.totalorder %s21, 1
      %p86 = por %p84, %p85
      %p88 = scmp.ne.s32.totalorder %s73, %s87
      %p89 = scmp.eq.s32.totalorder %s21, 0
      %p90 = por %p88, %p89
      %s92 = sadd.s32 %s91, 1
      %p95 = scmp.eq.s32.totalorder %s15, 1
      %p96 = scmp.ne.s32.totalorder %s91, %s93
      %p97 = scmp.eq.s32.totalorder %s15, 0
      %p98 = por %p96, %p97
      %p99 = scmp.ne.s32.totalorder %s91, %s93
      %p100 = scmp.eq.s32.totalorder %s20, 1
      %p101 = por %p99, %p100
      %p102 = scmp.ne.s32.totalorder %s93, %s94
      %p103 = scmp.eq.s32.totalorder %s20, 0
      %p104 = por %p102, %p103
      %p105 = scmp.ne.s32.totalorder %s93, %s94
      %p106 = scmp.eq.s32.totalorder %s21, 1
      %p107 = por %p105, %p106
      %p109 = scmp.ne.s32.totalorder %s94, %s108
      %p110 = scmp.eq.s32.totalorder %s21, 0
      %p111 = por %p109, %p110
      %s113 = sadd.s32 %s112, 1
      %p116 = scmp.eq.s32.totalorder %s15, 1
      %p117 = scmp.ne.s32.totalorder %s112, %s114
      %p118 = scmp.eq.s32.totalorder %s15, 0
      %p119 = por %p117, %p118
      %p120 = scmp.ne.s32.totalorder %s112, %s114
      %p121 = scmp.eq.s32.totalorder %s20, 1
      %p122 = por %p120, %p121
      %p123 = scmp.ne.s32.totalorder %s114, %s115
      %p124 = scmp.eq.s32.totalorder %s20, 0
      %p125 = por %p123, %p124
      %p126 = scmp.ne.s32.totalorder %s114, %s115
      %p127 = scmp.eq.s32.totalorder %s21, 1
      %p128 = por %p126, %p127
      %p130 = scmp.ne.s32.totalorder %s115, %s129
      %p131 = scmp.eq.s32.totalorder %s21, 0
      %p132 = por %p130, %p131
      %s134 = sadd.s32 %s133, 1
      %p137 = scmp.eq.s32.totalorder %s15, 1
      %p138 = scmp.ne.s32.totalorder %s133, %s135
      %p139 = scmp.eq.s32.totalorder %s15, 0
      %p140 = por %p138, %p139
      %p141 = scmp.ne.s32.totalorder %s133, %s135
      %p142 = scmp.eq.s32.totalorder %s20, 1
      %p143 = por %p141, %p142
      %p144 = scmp.ne.s32.totalorder %s135, %s136
      %p145 = scmp.eq.s32.totalorder %s20, 0
      %p146 = por %p144, %p145
      %p147 = scmp.ne.s32.totalorder %s135, %s136
      %p148 = scmp.eq.s32.totalorder %s21, 1
      %p149 = por %p147, %p148
      %p151 = scmp.ne.s32.totalorder %s136, %s150
      %p152 = scmp.eq.s32.totalorder %s21, 0
      %p153 = por %p151, %p152
      %s154 = ssub.s32 %s15, %s22
      %p155 = scmp.eq.s32.totalorder %s154, 0
      %s157 = sadd.s32 %s156, 1
      %s158 = scalar_select %p155, %s156, %s157
      %p161 = pneg %p155
      %p162 = scmp.eq.s32.totalorder %s15, 1
      %p163 = por %p161, %p162
      %p164 = scmp.ne.s32.totalorder %s156, %s159
      %p165 = scmp.eq.s32.totalorder %s15, 0
      %p166 = por %p164, %p165
      %p167 = scmp.ne.s32.totalorder %s156, %s159
      %p168 = scmp.eq.s32.totalorder %s20, 1
      %p169 = por %p167, %p168
      %p170 = scmp.ne.s32.totalorder %s159, %s160
      %p171 = scmp.eq.s32.totalorder %s20, 0
      %p172 = por %p170, %p171
      %p173 = scmp.ne.s32.totalorder %s159, %s160
      %p174 = scmp.eq.s32.totalorder %s21, 1
      %p175 = por %p173, %p174
      %p177 = scmp.ne.s32.totalorder %s160, %s176
      %p178 = scmp.eq.s32.totalorder %s21, 0
      %p179 = por %p177, %p178
      %p180 = scmp.le.s32.totalorder 1, %s15
      %p181 = scmp.lt.s32.totalorder %s15, 3
      %p182 = pnand %p180, %p181
      %p183 = pneg %p182
      // Predicated region
      $region9: #{tpu_custom_call.1} parent=5 // pred_check
        _
      $region10: #{tpu_custom_call.1} parent=5 // pred_check_branch
        %185 = sbr.rel (%p182) target = $region12
      $region11: #{tpu_custom_call.1} parent=5 // pred_region
        %s186 = ssub.s32 %s15, 1
        // Predicated region
        $region13: #{tpu_custom_call.1} parent=11 // pred_check
          %p187 = pneg %p62
        $region14: #{tpu_custom_call.1} parent=11 // pred_check_branch
          %189 = sbr.rel (%p187) target = $region16
        $region15: #{tpu_custom_call.1} parent=11 // pred_region
          _
        $region16: #{tpu_custom_call.1} parent=11 // pred_fallthru
          _
        // Predicated region
        $region17: #{tpu_custom_call.1} parent=11 // pred_check
          %p190 = pneg %p83
        $region18: #{tpu_custom_call.1} parent=11 // pred_check_branch
          %192 = sbr.rel (%p190) target = $region20
        $region19: #{tpu_custom_call.1} parent=11 // pred_region
          _
        $region20: #{tpu_custom_call.1} parent=11 // pred_fallthru
          _
        // Predicated region
        $region21: #{tpu_custom_call.1} parent=11 // pred_check
          %p193 = pneg %p104
        $region22: #{tpu_custom_call.1} parent=11 // pred_check_branch
          %195 = sbr.rel (%p193) target = $region24
        $region23: #{tpu_custom_call.1} parent=11 // pred_region
          _
        $region24: #{tpu_custom_call.1} parent=11 // pred_fallthru
          _
        // Predicated region
        $region25: #{tpu_custom_call.1} parent=11 // pred_check
          %p196 = pneg %p125
        $region26: #{tpu_custom_call.1} parent=11 // pred_check_branch
          %198 = sbr.rel (%p196) target = $region28
        $region27: #{tpu_custom_call.1} parent=11 // pred_region
          _
        $region28: #{tpu_custom_call.1} parent=11 // pred_fallthru
          _
        // Predicated region
        $region29: #{tpu_custom_call.1} parent=11 // pred_check
          %p199 = pneg %p146
        $region30: #{tpu_custom_call.1} parent=11 // pred_check_branch
          %201 = sbr.rel (%p199) target = $region32
        $region31: #{tpu_custom_call.1} parent=11 // pred_region
          _
        $region32: #{tpu_custom_call.1} parent=11 // pred_fallthru
          _
      $region12: #{tpu_custom_call.1} parent=5 // pred_fallthru
        _
      %p202 = scmp.lt.s32.totalorder %s15, 2
      // Predicated region
      $region33: #{tpu_custom_call.1} parent=5 // pred_check
        %p203 = pneg %p202
      $region34: #{tpu_custom_call.1} parent=5 // pred_check_branch
        %205 = sbr.rel (%p203) target = $region36
      $region35: #{tpu_custom_call.1} parent=5 // pred_region
        // Predicated region
        $region37: #{tpu_custom_call.1} parent=35 // pred_check
          %p206 = pneg %p35
        $region38: #{tpu_custom_call.1} parent=35 // pred_check_branch
          %208 = sbr.rel (%p206) target = $region40
        $region39: #{tpu_custom_call.1} parent=35 // pred_region
          %p209 = scmp.lt.s32.totalorder %s15, 1
          %s210 = scalar_select %p209, %s15, 1
          %s211 = smul.addr %s210, 8
          %s212 = scalar_lea.vmem %s0, %s211
        $region40: #{tpu_custom_call.1} parent=35 // pred_fallthru
          _
      $region36: #{tpu_custom_call.1} parent=5 // pred_fallthru
        _
      %p213 = scmp.le.s32.totalorder 1, %s15
      %p214 = scmp.lt.s32.totalorder %s15, 3
      %p215 = pnand %p213, %p214
      %p216 = pneg %p215
      // Predicated region
      $region41: #{tpu_custom_call.1} parent=5 // pred_check
        _
      $region42: #{tpu_custom_call.1} parent=5 // pred_check_branch
        %218 = sbr.rel (%p215) target = $region44
      $region43: #{tpu_custom_call.1} parent=5 // pred_region
        %s219 = ssub.s32 %s15, 1
        %p220 = scmp.lt.s32.totalorder %s20, 1
        %s221 = scalar_select %p220, %s20, 1
        %s222 = smul.addr %s221, 8
        %s223 = scalar_lea.vmem %s0, %s222
        %p224 = pneg %p41
        %p225 = pneg %p38
        %p226 = pneg %p62
        %p227 = pneg %p59
        %p228 = pneg %p83
        %p229 = pneg %p80
        %p230 = pneg %p104
        %p231 = pneg %p101
        %p232 = pneg %p125
        %p233 = pneg %p122
        %p234 = pneg %p146
        %p235 = pneg %p143
        %p236 = pneg %p172
        %p237 = pneg %p169
        %s238 = sand.u32 %s159, 1
        %s239 = scalar_lea.sflag [#allocation3], %s238
        %s240 = sand.u32 %s159, 1
        %s241 = smul.addr %s240, 3
        %s242 = scalar_lea.vmem [#allocation2], %s241
        %p243 = scmp.lt.s32.totalorder %s20, 1
        %s244 = scalar_select %p243, %s20, 1
        %s245 = smul.addr %s244, 8
        %s246 = scalar_lea.vmem %s0, %s245
        %v247 = vld [vmem:[%s246] sm:$0xff]
        %v248 = vld [vmem:[%s1] sm:$0x7]
        %v250 = vrot.slane %v247, 7
        %vm252 = vcmask 1040384
        %v253 = vsel %vm252, 0.0, %v250
        %v254 = vrot.slane %v247, 1
        %vm256 = vcmask 1046528
        %v257 = vsel %vm256, %v254, 0.0
        %259 = vset.pattern.permute.xlu0 0
        %260 = vperm.xlu0 %259, %v257
        %v261 = vpop.permute.xlu0 %260
        %v263 = vlaneseq
        %v264 = vshrl.u32 %v263, 7
        %v265 = vsub.s32 0, %v264
        %v266 = vrot.slane %v248, %v265
        %v267 = vmul.f32 %v261, %v266
        %268 = vset.pattern.permute.xlu0 0
        %269 = vperm.xlu0 %268, %v247
        %v270 = vpop.permute.xlu0 %269
        %v272 = vlaneseq
        %v273 = vshrl.u32 %v272, 7
        %v274 = vsub.s32 1, %v273
        %v275 = vrot.slane %v248, %v274
        %v276 = vmul.f32 %v270, %v275
        %v277 = vadd.f32 %v267, %v276
        %279 = vset.pattern.permute.xlu0 0
        %280 = vperm.xlu0 %279, %v253
        %v281 = vpop.permute.xlu0 %280
        %v283 = vlaneseq
        %v284 = vshrl.u32 %v283, 7
        %v285 = vsub.s32 2, %v284
        %v286 = vrot.slane %v248, %v285
        %v287 = vmul.f32 %v281, %v286
        %v288 = vadd.f32 %v277, %v287
        %v289 = vld [vmem:[%s2] sm:$0xff]
        %v290 = vld [vmem:[%s2 + $0x8] sm:$0xff]
        %v291 = vld [vmem:[%s2 + $0x10] sm:$0xff]
        %v292 = vld [vmem:[%s2 + $0x18] sm:$0xff]
        %v293 = vld [vmem:[%s2 + $0x20] sm:$0xff]
        %v294 = vld [vmem:[%s2 + $0x28] sm:$0xff]
        %v295 = vld [vmem:[%s2 + $0x30] sm:$0xff]
        %v296 = vld [vmem:[%s2 + $0x38] sm:$0xff]
        %v297 = vld [vmem:[%s2 + $0x40] sm:$0xff]
        %v298 = vld [vmem:[%s2 + $0x48] sm:$0xff]
        %v299 = vld [vmem:[%s2 + $0x50] sm:$0xff]
        %v300 = vld [vmem:[%s2 + $0x58] sm:$0xff]
        %v301 = vld [vmem:[%s2 + $0x60] sm:$0xff]
        %v302 = vld [vmem:[%s2 + $0x68] sm:$0xff]
        %v303 = vld [vmem:[%s2 + $0x70] sm:$0xff]
        %v304 = vld [vmem:[%s2 + $0x78] sm:$0xff]
        %v305 = vld [vmem:[%s2 + $0x80] sm:$0xff]
        %v306 = vld [vmem:[%s2 + $0x88] sm:$0xff]
        %v307 = vld [vmem:[%s2 + $0x90] sm:$0xff]
        %v308 = vld [vmem:[%s2 + $0x98] sm:$0xff]
        %v309 = vld [vmem:[%s2 + $0xa0] sm:$0xff]
        %v310 = vld [vmem:[%s2 + $0xa8] sm:$0xff]
        %v311 = vld [vmem:[%s2 + $0xb0] sm:$0xff]
        %v312 = vld [vmem:[%s2 + $0xb8] sm:$0xff]
        %v314 = vrot.slane %v288, 7
        %315 = vrot.lane.b32.xlu0 %v314, 64
        %v316 = vpop.permute.xlu0 %315
        %v318 = vsel %vm252, 0.0, %v316
        %319 = vrot.lane.b32.xlu0 %v288, 64
        %v320 = vpop.permute.xlu0 %319
        %vm322 = vcmask 523264
        %v324 = vsel %vm322, %v318, 0
        %326 = vmatprep.subr.mxu0 0.0
        %327 = vmatpush1.msra.mxu0 %v289
        %328 = vmatprep.subr.mxu0 0.0
        %329 = vmatpush1.msra.mxu0 %v290
        %330 = vmatprep.subr.mxu0 0.0
        %331 = vmatpush1.msra.mxu0 %v291
        %332 = vmatprep.subr.mxu0 0.0
        %333 = vmatpush1.msra.mxu0 %v292
        %334 = vmatprep.subr.mxu0 0.0
        %335 = vmatpush1.msra.mxu0 %v293
        %336 = vmatprep.subr.mxu0 0.0
        %337 = vmatpush1.msra.mxu0 %v294
        %338 = vmatprep.subr.mxu0 0.0
        %339 = vmatpush1.msra.mxu0 %v295
        %340 = vmatprep.subr.mxu0 0.0
        %341 = vmatpush1.msra.mxu0 %v296
        %342 = vmatprep.subr.mxu0 0.0
        %343 = vmatpush1.msra.mxu0 %v297
        %344 = vmatprep.subr.mxu0 0.0
        %345 = vmatpush1.msra.mxu0 %v298
        %346 = vmatprep.subr.mxu0 0.0
        %347 = vmatpush1.msra.mxu0 %v299
        %348 = vmatprep.subr.mxu0 0.0
        %349 = vmatpush1.msra.mxu0 %v300
        %350 = vmatprep.subr.mxu0 0.0
        %351 = vmatpush1.msra.mxu0 %v301
        %352 = vmatprep.subr.mxu0 0.0
        %353 = vmatpush1.msra.mxu0 %v302
        %354 = vmatprep.subr.mxu0 0.0
        %355 = vmatpush1.msra.mxu0 %v303
        %356 = vmatprep.subr.mxu0 0.0
        %357 = vmatpush1.msra.mxu0 %v304
        %358 = vmatprep.subr.mxu0 0.0
        %359 = vmatpush1.msra.mxu0 %v305
        %360 = vmatprep.subr.mxu0 0.0
        %361 = vmatpush1.msra.mxu0 %v306
        %362 = vmatprep.subr.mxu0 0.0
        %363 = vmatpush1.msra.mxu0 %v307
        %364 = vmatprep.subr.mxu0 0.0
        %365 = vmatpush1.msra.mxu0 %v308
        %366 = vmatprep.subr.mxu0 0.0
        %367 = vmatpush1.msra.mxu0 %v309
        %368 = vmatprep.subr.mxu0 0.0
        %369 = vmatpush1.msra.mxu0 %v310
        %370 = vmatprep.subr.mxu0 0.0
        %371 = vmatpush1.msra.mxu0 %v311
        %372 = vmatprep.subr.mxu0 0.0
        %373 = vmatpush1.msra.mxu0 %v312
        %374 = vmatprep.subr.mxu0 0.0
        %375 = vmatpush1.msra.mxu0 0.0
        %376 = vmatprep.subr.mxu0 0.0
        %377 = vmatpush1.msra.mxu0 0.0
        %378 = vmatprep.subr.mxu0 0.0
        %379 = vmatpush1.msra.mxu0 0.0
        %380 = vmatprep.subr.mxu0 0.0
        %381 = vmatpush1.msra.mxu0 0.0
        %382 = vmatprep.subr.mxu0 0.0
        %383 = vmatpush1.msra.mxu0 0.0
        %384 = vmatprep.subr.mxu0 0.0
        %385 = vmatpush1.msra.mxu0 0.0
        %386 = vmatprep.subr.mxu0 0.0
        %387 = vmatpush1.msra.mxu0 0.0
        %388 = vmatprep.subr.mxu0 0.0
        %389 = vmatpush1.msra.mxu0 0.0
        %390 = vmatprep.mubr.f32.mxu0 %v324
        %391 = vmatmul.mubr.f32.gmra.mrb[0].mxu0 %v320
        %v392 = vpop.f32.mrb[0].mxu0
        %v393 = vadd.f32 0.0, %v392
        %v394 = vpop.f32.mrb[0].mxu0
        %395 = vdwg.mxu0
        %v396 = vrot.slane %v288, 1
        %v398 = vsel %vm256, %v396, 0.0
        %v399 = vsel %vm322, %v398, %v288
        %v400 = vsel %vm322, %v288, 0
        %402 = vmatprep.subr.mxu0 0.0
        %403 = vmatpush1.msra.mxu0 %v289
        %404 = vmatprep.subr.mxu0 0.0
        %405 = vmatpush1.msra.mxu0 %v290
        %406 = vmatprep.subr.mxu0 0.0
        %407 = vmatpush1.msra.mxu0 %v291
        %408 = vmatprep.subr.mxu0 0.0
        %409 = vmatpush1.msra.mxu0 %v292
        %410 = vmatprep.subr.mxu0 0.0
        %411 = vmatpush1.msra.mxu0 %v293
        %412 = vmatprep.subr.mxu0 0.0
        %413 = vmatpush1.msra.mxu0 %v294
        %414 = vmatprep.subr.mxu0 0.0
        %415 = vmatpush1.msra.mxu0 %v295
        %416 = vmatprep.subr.mxu0 0.0
        %417 = vmatpush1.msra.mxu0 %v296
        %418 = vmatprep.subr.mxu0 0.0
        %419 = vmatpush1.msra.mxu0 %v297
        %420 = vmatprep.subr.mxu0 0.0
        %421 = vmatpush1.msra.mxu0 %v298
        %422 = vmatprep.subr.mxu0 0.0
        %423 = vmatpush1.msra.mxu0 %v299
        %424 = vmatprep.subr.mxu0 0.0
        %425 = vmatpush1.msra.mxu0 %v300
        %426 = vmatprep.subr.mxu0 0.0
        %427 = vmatpush1.msra.mxu0 %v301
        %428 = vmatprep.subr.mxu0 0.0
        %429 = vmatpush1.msra.mxu0 %v302
        %430 = vmatprep.subr.mxu0 0.0
        %431 = vmatpush1.msra.mxu0 %v303
        %432 = vmatprep.subr.mxu0 0.0
        %433 = vmatpush1.msra.mxu0 %v304
        %434 = vmatprep.subr.mxu0 0.0
        %435 = vmatpush1.msra.mxu0 %v305
        %436 = vmatprep.subr.mxu0 0.0
        %437 = vmatpush1.msra.mxu0 %v306
        %438 = vmatprep.subr.mxu0 0.0
        %439 = vmatpush1.msra.mxu0 %v307
        %440 = vmatprep.subr.mxu0 0.0
        %441 = vmatpush1.msra.mxu0 %v308
        %442 = vmatprep.subr.mxu0 0.0
        %443 = vmatpush1.msra.mxu0 %v309
        %444 = vmatprep.subr.mxu0 0.0
        %445 = vmatpush1.msra.mxu0 %v310
        %446 = vmatprep.subr.mxu0 0.0
        %447 = vmatpush1.msra.mxu0 %v311
        %448 = vmatprep.subr.mxu0 0.0
        %449 = vmatpush1.msra.mxu0 %v312
        %450 = vmatprep.subr.mxu0 0.0
        %451 = vmatpush1.msra.mxu0 0.0
        %452 = vmatprep.subr.mxu0 0.0
        %453 = vmatpush1.msra.mxu0 0.0
        %454 = vmatprep.subr.mxu0 0.0
        %455 = vmatpush1.msra.mxu0 0.0
        %456 = vmatprep.subr.mxu0 0.0
        %457 = vmatpush1.msra.mxu0 0.0
        %458 = vmatprep.subr.mxu0 0.0
        %459 = vmatpush1.msra.mxu0 0.0
        %460 = vmatprep.subr.mxu0 0.0
        %461 = vmatpush1.msra.mxu0 0.0
        %462 = vmatprep.subr.mxu0 0.0
        %463 = vmatpush1.msra.mxu0 0.0
        %464 = vmatprep.subr.mxu0 0.0
        %465 = vmatpush1.msra.mxu0 0.0
        %466 = vmatprep.mubr.f32.mxu0 %v400
        %467 = vmatmul.mubr.f32.gmra.mrb[0].mxu0 %v399
        %v468 = vpop.f32.mrb[0].mxu0
        %v469 = vadd.f32 0.0, %v468
        %v470 = vpop.f32.mrb[0].mxu0
        %471 = vdwg.mxu0
        %v472 = vld [vmem:[%s3] sm:$0xff]
        %v473 = vld [vmem:[%s3 + $0x8] sm:$0xff]
        %v474 = vld [vmem:[%s3 + $0x10] sm:$0xff]
        %v475 = vld [vmem:[%s3 + $0x18] sm:$0xff]
        %v476 = vld [vmem:[%s3 + $0x20] sm:$0xff]
        %v477 = vld [vmem:[%s3 + $0x28] sm:$0xff]
        %v478 = vld [vmem:[%s3 + $0x30] sm:$0xff]
        %v479 = vld [vmem:[%s3 + $0x38] sm:$0xff]
        %v480 = vld [vmem:[%s3 + $0x40] sm:$0xff]
        %v481 = vld [vmem:[%s3 + $0x48] sm:$0xff]
        %v482 = vld [vmem:[%s3 + $0x50] sm:$0xff]
        %v483 = vld [vmem:[%s3 + $0x58] sm:$0xff]
        %v485 = vrot.slane %v469, 7
        %486 = vrot.lane.b32.xlu0 %v485, 96
        %v487 = vpop.permute.xlu0 %486
        %v489 = vsel %vm252, 0.0, %v487
        %491 = vrot.lane.b32.xlu0 %v393, 96
        %v492 = vpop.permute.xlu0 %491
        %494 = vrot.lane.b32.xlu0 %v393, 32
        %v495 = vpop.permute.xlu0 %494
        %498 = vrot.lane.b32.xlu0 %v489, 64
        %v499 = vpop.permute.xlu0 %498
        %vm501 = vcmask 261120
        %v502 = vsel %vm501, %v492, %v495
        %v503 = vsel %vm322, %v502, %v499
        %vm504 = vcmask 785408
        %v506 = vsel %vm504, %v503, 0
        %508 = vmatprep.subr.mxu0 0.0
        %509 = vmatpush1.msra.mxu0 %v472
        %510 = vmatprep.subr.mxu0 0.0
        %511 = vmatpush1.msra.mxu0 %v473
        %512 = vmatprep.subr.mxu0 0.0
        %513 = vmatpush1.msra.mxu0 %v474
        %514 = vmatprep.subr.mxu0 0.0
        %515 = vmatpush1.msra.mxu0 %v475
        %516 = vmatprep.subr.mxu0 0.0
        %517 = vmatpush1.msra.mxu0 %v476
        %518 = vmatprep.subr.mxu0 0.0
        %519 = vmatpush1.msra.mxu0 %v477
        %520 = vmatprep.subr.mxu0 0.0
        %521 = vmatpush1.msra.mxu0 %v478
        %522 = vmatprep.subr.mxu0 0.0
        %523 = vmatpush1.msra.mxu0 %v479
        %524 = vmatprep.subr.mxu0 0.0
        %525 = vmatpush1.msra.mxu0 %v480
        %526 = vmatprep.subr.mxu0 0.0
        %527 = vmatpush1.msra.mxu0 %v481
        %528 = vmatprep.subr.mxu0 0.0
        %529 = vmatpush1.msra.mxu0 %v482
        %530 = vmatprep.subr.mxu0 0.0
        %531 = vmatpush1.msra.mxu0 %v483
        %532 = vmatprep.subr.mxu0 0.0
        %533 = vmatpush1.msra.mxu0 0.0
        %534 = vmatprep.subr.mxu0 0.0
        %535 = vmatpush1.msra.mxu0 0.0
        %536 = vmatprep.subr.mxu0 0.0
        %537 = vmatpush1.msra.mxu0 0.0
        %538 = vmatprep.subr.mxu0 0.0
        %539 = vmatpush1.msra.mxu0 0.0
        %540 = vmatprep.subr.mxu0 0.0
        %541 = vmatpush1.msra.mxu0 0.0
        %542 = vmatprep.subr.mxu0 0.0
        %543 = vmatpush1.msra.mxu0 0.0
        %544 = vmatprep.subr.mxu0 0.0
        %545 = vmatpush1.msra.mxu0 0.0
        %546 = vmatprep.subr.mxu0 0.0
        %547 = vmatpush1.msra.mxu0 0.0
        %548 = vmatprep.subr.mxu0 0.0
        %549 = vmatpush1.msra.mxu0 0.0
        %550 = vmatprep.subr.mxu0 0.0
        %551 = vmatpush1.msra.mxu0 0.0
        %552 = vmatprep.subr.mxu0 0.0
        %553 = vmatpush1.msra.mxu0 0.0
        %554 = vmatprep.subr.mxu0 0.0
        %555 = vmatpush1.msra.mxu0 0.0
        %556 = vmatprep.subr.mxu0 0.0
        %557 = vmatpush1.msra.mxu0 0.0
        %558 = vmatprep.subr.mxu0 0.0
        %559 = vmatpush1.msra.mxu0 0.0
        %560 = vmatprep.subr.mxu0 0.0
        %561 = vmatpush1.msra.mxu0 0.0
        %562 = vmatprep.subr.mxu0 0.0
        %563 = vmatpush1.msra.mxu0 0.0
        %564 = vmatprep.subr.mxu0 0.0
        %565 = vmatpush1.msra.mxu0 0.0
        %566 = vmatprep.subr.mxu0 0.0
        %567 = vmatpush1.msra.mxu0 0.0
        %568 = vmatprep.subr.mxu0 0.0
        %569 = vmatpush1.msra.mxu0 0.0
        %570 = vmatprep.subr.mxu0 0.0
        %571 = vmatpush1.msra.mxu0 0.0
        %572 = vmatprep.mubr.f32.mxu0 0.0
        %573 = vmatmul.mubr.f32.gmra.mrb[0].mxu0 %v506
        %v574 = vpop.f32.mrb[0].mxu0
        %v575 = vadd.f32 0.0, %v574
        %v576 = vpop.f32.mrb[0].mxu0
        %577 = vdwg.mxu0
        %578 = vrot.lane.b32.xlu0 %v393, 64
        %v579 = vpop.permute.xlu0 %578
        %v581 = vsel %vm501, %v469, %v393
        %v582 = vsel %vm322, %v581, %v579
        %v584 = vsel %vm504, %v582, 0
        %586 = vmatprep.subr.mxu0 0.0
        %587 = vmatpush1.msra.mxu0 %v472
        %588 = vmatprep.subr.mxu0 0.0
        %589 = vmatpush1.msra.mxu0 %v473
        %590 = vmatprep.subr.mxu0 0.0
        %591 = vmatpush1.msra.mxu0 %v474
        %592 = vmatprep.subr.mxu0 0.0
        %593 = vmatpush1.msra.mxu0 %v475
        %594 = vmatprep.subr.mxu0 0.0
        %595 = vmatpush1.msra.mxu0 %v476
        %596 = vmatprep.subr.mxu0 0.0
        %597 = vmatpush1.msra.mxu0 %v477
        %598 = vmatprep.subr.mxu0 0.0
        %599 = vmatpush1.msra.mxu0 %v478
        %600 = vmatprep.subr.mxu0 0.0
        %601 = vmatpush1.msra.mxu0 %v479
        %602 = vmatprep.subr.mxu0 0.0
        %603 = vmatpush1.msra.mxu0 %v480
        %604 = vmatprep.subr.mxu0 0.0
        %605 = vmatpush1.msra.mxu0 %v481
        %606 = vmatprep.subr.mxu0 0.0
        %607 = vmatpush1.msra.mxu0 %v482
        %608 = vmatprep.subr.mxu0 0.0
        %609 = vmatpush1.msra.mxu0 %v483
        %610 = vmatprep.subr.mxu0 0.0
        %611 = vmatpush1.msra.mxu0 0.0
        %612 = vmatprep.subr.mxu0 0.0
        %613 = vmatpush1.msra.mxu0 0.0
        %614 = vmatprep.subr.mxu0 0.0
        %615 = vmatpush1.msra.mxu0 0.0
        %616 = vmatprep.subr.mxu0 0.0
        %617 = vmatpush1.msra.mxu0 0.0
        %618 = vmatprep.subr.mxu0 0.0
        %619 = vmatpush1.msra.mxu0 0.0
        %620 = vmatprep.subr.mxu0 0.0
        %621 = vmatpush1.msra.mxu0 0.0
        %622 = vmatprep.subr.mxu0 0.0
        %623 = vmatpush1.msra.mxu0 0.0
        %624 = vmatprep.subr.mxu0 0.0
        %625 = vmatpush1.msra.mxu0 0.0
        %626 = vmatprep.subr.mxu0 0.0
        %627 = vmatpush1.msra.mxu0 0.0
        %628 = vmatprep.subr.mxu0 0.0
        %629 = vmatpush1.msra.mxu0 0.0
        %630 = vmatprep.subr.mxu0 0.0
        %631 = vmatpush1.msra.mxu0 0.0
        %632 = vmatprep.subr.mxu0 0.0
        %633 = vmatpush1.msra.mxu0 0.0
        %634 = vmatprep.subr.mxu0 0.0
        %635 = vmatpush1.msra.mxu0 0.0
        %636 = vmatprep.subr.mxu0 0.0
        %637 = vmatpush1.msra.mxu0 0.0
        %638 = vmatprep.subr.mxu0 0.0
        %639 = vmatpush1.msra.mxu0 0.0
        %640 = vmatprep.subr.mxu0 0.0
        %641 = vmatpush1.msra.mxu0 0.0
        %642 = vmatprep.subr.mxu0 0.0
        %643 = vmatpush1.msra.mxu0 0.0
        %644 = vmatprep.subr.mxu0 0.0
        %645 = vmatpush1.msra.mxu0 0.0
        %646 = vmatprep.subr.mxu0 0.0
        %647 = vmatpush1.msra.mxu0 0.0
        %648 = vmatprep.subr.mxu0 0.0
        %649 = vmatpush1.msra.mxu0 0.0
        %650 = vmatprep.mubr.f32.mxu0 0.0
        %651 = vmatmul.mubr.f32.gmra.mrb[0].mxu0 %v584
        %v652 = vpop.f32.mrb[0].mxu0
        %v653 = vadd.f32 0.0, %v652
        %v654 = vpop.f32.mrb[0].mxu0
        %655 = vdwg.mxu0
        %656 = vrot.lane.b32.xlu0 %v469, 96
        %v657 = vpop.permute.xlu0 %656
        %659 = vrot.lane.b32.xlu0 %v469, 32
        %v660 = vpop.permute.xlu0 %659
        %v662 = vsel %vm501, %v657, %v660
        %v663 = vsel %vm322, %v662, %v495
        %v665 = vsel %vm504, %v663, 0
        %667 = vmatprep.subr.mxu0 0.0
        %668 = vmatpush1.msra.mxu0 %v472
        %669 = vmatprep.subr.mxu0 0.0
        %670 = vmatpush1.msra.mxu0 %v473
        %671 = vmatprep.subr.mxu0 0.0
        %672 = vmatpush1.msra.mxu0 %v474
        %673 = vmatprep.subr.mxu0 0.0
        %674 = vmatpush1.msra.mxu0 %v475
        %675 = vmatprep.subr.mxu0 0.0
        %676 = vmatpush1.msra.mxu0 %v476
        %677 = vmatprep.subr.mxu0 0.0
        %678 = vmatpush1.msra.mxu0 %v477
        %679 = vmatprep.subr.mxu0 0.0
        %680 = vmatpush1.msra.mxu0 %v478
        %681 = vmatprep.subr.mxu0 0.0
        %682 = vmatpush1.msra.mxu0 %v479
        %683 = vmatprep.subr.mxu0 0.0
        %684 = vmatpush1.msra.mxu0 %v480
        %685 = vmatprep.subr.mxu0 0.0
        %686 = vmatpush1.msra.mxu0 %v481
        %687 = vmatprep.subr.mxu0 0.0
        %688 = vmatpush1.msra.mxu0 %v482
        %689 = vmatprep.subr.mxu0 0.0
        %690 = vmatpush1.msra.mxu0 %v483
        %691 = vmatprep.subr.mxu0 0.0
        %692 = vmatpush1.msra.mxu0 0.0
        %693 = vmatprep.subr.mxu0 0.0
        %694 = vmatpush1.msra.mxu0 0.0
        %695 = vmatprep.subr.mxu0 0.0
        %696 = vmatpush1.msra.mxu0 0.0
        %697 = vmatprep.subr.mxu0 0.0
        %698 = vmatpush1.msra.mxu0 0.0
        %699 = vmatprep.subr.mxu0 0.0
        %700 = vmatpush1.msra.mxu0 0.0
        %701 = vmatprep.subr.mxu0 0.0
        %702 = vmatpush1.msra.mxu0 0.0
        %703 = vmatprep.subr.mxu0 0.0
        %704 = vmatpush1.msra.mxu0 0.0
        %705 = vmatprep.subr.mxu0 0.0
        %706 = vmatpush1.msra.mxu0 0.0
        %707 = vmatprep.subr.mxu0 0.0
        %708 = vmatpush1.msra.mxu0 0.0
        %709 = vmatprep.subr.mxu0 0.0
        %710 = vmatpush1.msra.mxu0 0.0
        %711 = vmatprep.subr.mxu0 0.0
        %712 = vmatpush1.msra.mxu0 0.0
        %713 = vmatprep.subr.mxu0 0.0
        %714 = vmatpush1.msra.mxu0 0.0
        %715 = vmatprep.subr.mxu0 0.0
        %716 = vmatpush1.msra.mxu0 0.0
        %717 = vmatprep.subr.mxu0 0.0
        %718 = vmatpush1.msra.mxu0 0.0
        %719 = vmatprep.subr.mxu0 0.0
        %720 = vmatpush1.msra.mxu0 0.0
        %721 = vmatprep.subr.mxu0 0.0
        %722 = vmatpush1.msra.mxu0 0.0
        %723 = vmatprep.subr.mxu0 0.0
        %724 = vmatpush1.msra.mxu0 0.0
        %725 = vmatprep.subr.mxu0 0.0
        %726 = vmatpush1.msra.mxu0 0.0
        %727 = vmatprep.subr.mxu0 0.0
        %728 = vmatpush1.msra.mxu0 0.0
        %729 = vmatprep.subr.mxu0 0.0
        %730 = vmatpush1.msra.mxu0 0.0
        %731 = vmatprep.mubr.f32.mxu0 0.0
        %732 = vmatmul.mubr.f32.gmra.mrb[0].mxu0 %v665
        %v733 = vpop.f32.mrb[0].mxu0
        %v734 = vadd.f32 0.0, %v733
        %v735 = vpop.f32.mrb[0].mxu0
        %736 = vdwg.mxu0
        %v737 = vrot.slane %v393, 1
        %v739 = vsel %vm256, %v737, 0.0
        %740 = vrot.lane.b32.xlu0 %v469, 64
        %v741 = vpop.permute.xlu0 %740
        %v743 = vsel %vm501, %v739, %v469
        %v744 = vsel %vm322, %v743, %v741
        %v746 = vsel %vm504, %v744, 0
        %748 = vmatprep.subr.mxu0 0.0
        %749 = vmatpush1.msra.mxu0 %v472
        %750 = vmatprep.subr.mxu0 0.0
        %751 = vmatpush1.msra.mxu0 %v473
        %752 = vmatprep.subr.mxu0 0.0
        %753 = vmatpush1.msra.mxu0 %v474
        %754 = vmatprep.subr.mxu0 0.0
        %755 = vmatpush1.msra.mxu0 %v475
        %756 = vmatprep.subr.mxu0 0.0
        %757 = vmatpush1.msra.mxu0 %v476
        %758 = vmatprep.subr.mxu0 0.0
        %759 = vmatpush1.msra.mxu0 %v477
        %760 = vmatprep.subr.mxu0 0.0
        %761 = vmatpush1.msra.mxu0 %v478
        %762 = vmatprep.subr.mxu0 0.0
        %763 = vmatpush1.msra.mxu0 %v479
        %764 = vmatprep.subr.mxu0 0.0
        %765 = vmatpush1.msra.mxu0 %v480
        %766 = vmatprep.subr.mxu0 0.0
        %767 = vmatpush1.msra.mxu0 %v481
        %768 = vmatprep.subr.mxu0 0.0
        %769 = vmatpush1.msra.mxu0 %v482
        %770 = vmatprep.subr.mxu0 0.0
        %771 = vmatpush1.msra.mxu0 %v483
        %772 = vmatprep.subr.mxu0 0.0
        %773 = vmatpush1.msra.mxu0 0.0
        %774 = vmatprep.subr.mxu0 0.0
        %775 = vmatpush1.msra.mxu0 0.0
        %776 = vmatprep.subr.mxu0 0.0
        %777 = vmatpush1.msra.mxu0 0.0
        %778 = vmatprep.subr.mxu0 0.0
        %779 = vmatpush1.msra.mxu0 0.0
        %780 = vmatprep.subr.mxu0 0.0
        %781 = vmatpush1.msra.mxu0 0.0
        %782 = vmatprep.subr.mxu0 0.0
        %783 = vmatpush1.msra.mxu0 0.0
        %784 = vmatprep.subr.mxu0 0.0
        %785 = vmatpush1.msra.mxu0 0.0
        %786 = vmatprep.subr.mxu0 0.0
        %787 = vmatpush1.msra.mxu0 0.0
        %788 = vmatprep.subr.mxu0 0.0
        %789 = vmatpush1.msra.mxu0 0.0
        %790 = vmatprep.subr.mxu0 0.0
        %791 = vmatpush1.msra.mxu0 0.0
        %792 = vmatprep.subr.mxu0 0.0
        %793 = vmatpush1.msra.mxu0 0.0
        %794 = vmatprep.subr.mxu0 0.0
        %795 = vmatpush1.msra.mxu0 0.0
        %796 = vmatprep.subr.mxu0 0.0
        %797 = vmatpush1.msra.mxu0 0.0
        %798 = vmatprep.subr.mxu0 0.0
        %799 = vmatpush1.msra.mxu0 0.0
        %800 = vmatprep.subr.mxu0 0.0
        %801 = vmatpush1.msra.mxu0 0.0
        %802 = vmatprep.subr.mxu0 0.0
        %803 = vmatpush1.msra.mxu0 0.0
        %804 = vmatprep.subr.mxu0 0.0
        %805 = vmatpush1.msra.mxu0 0.0
        %806 = vmatprep.subr.mxu0 0.0
        %807 = vmatpush1.msra.mxu0 0.0
        %808 = vmatprep.subr.mxu0 0.0
        %809 = vmatpush1.msra.mxu0 0.0
        %810 = vmatprep.subr.mxu0 0.0
        %811 = vmatpush1.msra.mxu0 0.0
        %812 = vmatprep.mubr.f32.mxu0 0.0
        %813 = vmatmul.mubr.f32.gmra.mrb[0].mxu0 %v746
        %v814 = vpop.f32.mrb[0].mxu0
        %v815 = vadd.f32 0.0, %v814
        %v816 = vpop.f32.mrb[0].mxu0
        %817 = vdwg.mxu0
        %v818 = vld [vmem:[%s4] sm:$0xff]
        %v819 = vld [vmem:[%s4 + $0x8] sm:$0xff]
        %v820 = vld [vmem:[%s4 + $0x10] sm:$0xff]
        %v821 = vld [vmem:[%s4 + $0x18] sm:$0xff]
        %v822 = vld [vmem:[%s4 + $0x20] sm:$0xff]
        %v823 = vld [vmem:[%s4 + $0x28] sm:$0xff]
        %v825 = vrot.slane %v815, 7
        %826 = vrot.lane.b32.xlu0 %v825, 112
        %v827 = vpop.permute.xlu0 %826
        %v829 = vsel %vm252, 0.0, %v827
        %831 = vrot.lane.b32.xlu0 %v575, 112
        %v832 = vpop.permute.xlu0 %831
        %834 = vrot.lane.b32.xlu0 %v575, 16
        %v835 = vpop.permute.xlu0 %834
        %838 = vrot.lane.b32.xlu0 %v829, 32
        %v839 = vpop.permute.xlu0 %838
        %vm841 = vcmask 130048
        %v842 = vsel %vm841, %v832, %v835
        %v843 = vsel %vm501, %v842, %v839
        %vm844 = vcmask 392192
        %v846 = vsel %vm844, %v843, 0
        %848 = vmatprep.subr.mxu0 0.0
        %849 = vmatpush1.msra.mxu0 %v818
        %850 = vmatprep.subr.mxu0 0.0
        %851 = vmatpush1.msra.mxu0 %v819
        %852 = vmatprep.subr.mxu0 0.0
        %853 = vmatpush1.msra.mxu0 %v820
        %854 = vmatprep.subr.mxu0 0.0
        %855 = vmatpush1.msra.mxu0 %v821
        %856 = vmatprep.subr.mxu0 0.0
        %857 = vmatpush1.msra.mxu0 %v822
        %858 = vmatprep.subr.mxu0 0.0
        %859 = vmatpush1.msra.mxu0 %v823
        %860 = vmatprep.subr.mxu0 0.0
        %861 = vmatpush1.msra.mxu0 0.0
        %862 = vmatprep.subr.mxu0 0.0
        %863 = vmatpush1.msra.mxu0 0.0
        %864 = vmatprep.subr.mxu0 0.0
        %865 = vmatpush1.msra.mxu0 0.0
        %866 = vmatprep.subr.mxu0 0.0
        %867 = vmatpush1.msra.mxu0 0.0
        %868 = vmatprep.subr.mxu0 0.0
        %869 = vmatpush1.msra.mxu0 0.0
        %870 = vmatprep.subr.mxu0 0.0
        %871 = vmatpush1.msra.mxu0 0.0
        %872 = vmatprep.subr.mxu0 0.0
        %873 = vmatpush1.msra.mxu0 0.0
        %874 = vmatprep.subr.mxu0 0.0
        %875 = vmatpush1.msra.mxu0 0.0
        %876 = vmatprep.subr.mxu0 0.0
        %877 = vmatpush1.msra.mxu0 0.0
        %878 = vmatprep.subr.mxu0 0.0
        %879 = vmatpush1.msra.mxu0 0.0
        %880 = vmatprep.subr.mxu0 0.0
        %881 = vmatpush1.msra.mxu0 0.0
        %882 = vmatprep.subr.mxu0 0.0
        %883 = vmatpush1.msra.mxu0 0.0
        %884 = vmatprep.subr.mxu0 0.0
        %885 = vmatpush1.msra.mxu0 0.0
        %886 = vmatprep.subr.mxu0 0.0
        %887 = vmatpush1.msra.mxu0 0.0
        %888 = vmatprep.subr.mxu0 0.0
        %889 = vmatpush1.msra.mxu0 0.0
        %890 = vmatprep.subr.mxu0 0.0
        %891 = vmatpush1.msra.mxu0 0.0
        %892 = vmatprep.subr.mxu0 0.0
        %893 = vmatpush1.msra.mxu0 0.0
        %894 = vmatprep.subr.mxu0 0.0
        %895 = vmatpush1.msra.mxu0 0.0
        %896 = vmatprep.subr.mxu0 0.0
        %897 = vmatpush1.msra.mxu0 0.0
        %898 = vmatprep.subr.mxu0 0.0
        %899 = vmatpush1.msra.mxu0 0.0
        %900 = vmatprep.subr.mxu0 0.0
        %901 = vmatpush1.msra.mxu0 0.0
        %902 = vmatprep.subr.mxu0 0.0
        %903 = vmatpush1.msra.mxu0 0.0
        %904 = vmatprep.subr.mxu0 0.0
        %905 = vmatpush1.msra.mxu0 0.0
        %906 = vmatprep.subr.mxu0 0.0
        %907 = vmatpush1.msra.mxu0 0.0
        %908 = vmatprep.subr.mxu0 0.0
        %909 = vmatpush1.msra.mxu0 0.0
        %910 = vmatprep.subr.mxu0 0.0
        %911 = vmatpush1.msra.mxu0 0.0
        %912 = vmatprep.mubr.f32.mxu0 0.0
        %913 = vmatmul.mubr.f32.gmra.mrb[0].mxu0 %v846
        %v914 = vpop.f32.mrb[0].mxu0
        %v915 = vadd.f32 0.0, %v914
        %v916 = vpop.f32.mrb[0].mxu0
        %917 = vdwg.mxu0
        %918 = vrot.lane.b32.xlu0 %v575, 32
        %v919 = vpop.permute.xlu0 %918
        %v921 = vsel %vm841, %v653, %v575
        %v922 = vsel %vm501, %v921, %v919
        %v924 = vsel %vm844, %v922, 0
        %926 = vmatprep.subr.mxu0 0.0
        %927 = vmatpush1.msra.mxu0 %v818
        %928 = vmatprep.subr.mxu0 0.0
        %929 = vmatpush1.msra.mxu0 %v819
        %930 = vmatprep.subr.mxu0 0.0
        %931 = vmatpush1.msra.mxu0 %v820
        %932 = vmatprep.subr.mxu0 0.0
        %933 = vmatpush1.msra.mxu0 %v821
        %934 = vmatprep.subr.mxu0 0.0
        %935 = vmatpush1.msra.mxu0 %v822
        %936 = vmatprep.subr.mxu0 0.0
        %937 = vmatpush1.msra.mxu0 %v823
        %938 = vmatprep.subr.mxu0 0.0
        %939 = vmatpush1.msra.mxu0 0.0
        %940 = vmatprep.subr.mxu0 0.0
        %941 = vmatpush1.msra.mxu0 0.0
        %942 = vmatprep.subr.mxu0 0.0
        %943 = vmatpush1.msra.mxu0 0.0
        %944 = vmatprep.subr.mxu0 0.0
        %945 = vmatpush1.msra.mxu0 0.0
        %946 = vmatprep.subr.mxu0 0.0
        %947 = vmatpush1.msra.mxu0 0.0
        %948 = vmatprep.subr.mxu0 0.0
        %949 = vmatpush1.msra.mxu0 0.0
        %950 = vmatprep.subr.mxu0 0.0
        %951 = vmatpush1.msra.mxu0 0.0
        %952 = vmatprep.subr.mxu0 0.0
        %953 = vmatpush1.msra.mxu0 0.0
        %954 = vmatprep.subr.mxu0 0.0
        %955 = vmatpush1.msra.mxu0 0.0
        %956 = vmatprep.subr.mxu0 0.0
        %957 = vmatpush1.msra.mxu0 0.0
        %958 = vmatprep.subr.mxu0 0.0
        %959 = vmatpush1.msra.mxu0 0.0
        %960 = vmatprep.subr.mxu0 0.0
        %961 = vmatpush1.msra.mxu0 0.0
        %962 = vmatprep.subr.mxu0 0.0
        %963 = vmatpush1.msra.mxu0 0.0
        %964 = vmatprep.subr.mxu0 0.0
        %965 = vmatpush1.msra.mxu0 0.0
        %966 = vmatprep.subr.mxu0 0.0
        %967 = vmatpush1.msra.mxu0 0.0
        %968 = vmatprep.subr.mxu0 0.0
        %969 = vmatpush1.msra.mxu0 0.0
        %970 = vmatprep.subr.mxu0 0.0
        %971 = vmatpush1.msra.mxu0 0.0
        %972 = vmatprep.subr.mxu0 0.0
        %973 = vmatpush1.msra.mxu0 0.0
        %974 = vmatprep.subr.mxu0 0.0
        %975 = vmatpush1.msra.mxu0 0.0
        %976 = vmatprep.subr.mxu0 0.0
        %977 = vmatpush1.msra.mxu0 0.0
        %978 = vmatprep.subr.mxu0 0.0
        %979 = vmatpush1.msra.mxu0 0.0
        %980 = vmatprep.subr.mxu0 0.0
        %981 = vmatpush1.msra.mxu0 0.0
        %982 = vmatprep.subr.mxu0 0.0
        %983 = vmatpush1.msra.mxu0 0.0
        %984 = vmatprep.subr.mxu0 0.0
        %985 = vmatpush1.msra.mxu0 0.0
        %986 = vmatprep.subr.mxu0 0.0
        %987 = vmatpush1.msra.mxu0 0.0
        %988 = vmatprep.subr.mxu0 0.0
        %989 = vmatpush1.msra.mxu0 0.0
        %990 = vmatprep.mubr.f32.mxu0 0.0
        %991 = vmatmul.mubr.f32.gmra.mrb[0].mxu0 %v924
        %v992 = vpop.f32.mrb[0].mxu0
        %v993 = vadd.f32 0.0, %v992
        %v994 = vpop.f32.mrb[0].mxu0
        %995 = vdwg.mxu0
        %997 = vrot.lane.b32.xlu0 %v653, 112
        %v998 = vpop.permute.xlu0 %997
        %1000 = vrot.lane.b32.xlu0 %v653, 16
        %v1001 = vpop.permute.xlu0 %1000
        %v1003 = vsel %vm841, %v998, %v1001
        %v1004 = vsel %vm501, %v1003, %v835
        %v1006 = vsel %vm844, %v1004, 0
        %1008 = vmatprep.subr.mxu0 0.0
        %1009 = vmatpush1.msra.mxu0 %v818
        %1010 = vmatprep.subr.mxu0 0.0
        %1011 = vmatpush1.msra.mxu0 %v819
        %1012 = vmatprep.subr.mxu0 0.0
        %1013 = vmatpush1.msra.mxu0 %v820
        %1014 = vmatprep.subr.mxu0 0.0
        %1015 = vmatpush1.msra.mxu0 %v821
        %1016 = vmatprep.subr.mxu0 0.0
        %1017 = vmatpush1.msra.mxu0 %v822
        %1018 = vmatprep.subr.mxu0 0.0
        %1019 = vmatpush1.msra.mxu0 %v823
        %1020 = vmatprep.subr.mxu0 0.0
        %1021 = vmatpush1.msra.mxu0 0.0
        %1022 = vmatprep.subr.mxu0 0.0
        %1023 = vmatpush1.msra.mxu0 0.0
        %1024 = vmatprep.subr.mxu0 0.0
        %1025 = vmatpush1.msra.mxu0 0.0
        %1026 = vmatprep.subr.mxu0 0.0
        %1027 = vmatpush1.msra.mxu0 0.0
        %1028 = vmatprep.subr.mxu0 0.0
        %1029 = vmatpush1.msra.mxu0 0.0
        %1030 = vmatprep.subr.mxu0 0.0
        %1031 = vmatpush1.msra.mxu0 0.0
        %1032 = vmatprep.subr.mxu0 0.0
        %1033 = vmatpush1.msra.mxu0 0.0
        %1034 = vmatprep.subr.mxu0 0.0
        %1035 = vmatpush1.msra.mxu0 0.0
        %1036 = vmatprep.subr.mxu0 0.0
        %1037 = vmatpush1.msra.mxu0 0.0
        %1038 = vmatprep.subr.mxu0 0.0
        %1039 = vmatpush1.msra.mxu0 0.0
        %1040 = vmatprep.subr.mxu0 0.0
        %1041 = vmatpush1.msra.mxu0 0.0
        %1042 = vmatprep.subr.mxu0 0.0
        %1043 = vmatpush1.msra.mxu0 0.0
        %1044 = vmatprep.subr.mxu0 0.0
        %1045 = vmatpush1.msra.mxu0 0.0
        %1046 = vmatprep.subr.mxu0 0.0
        %1047 = vmatpush1.msra.mxu0 0.0
        %1048 = vmatprep.subr.mxu0 0.0
        %1049 = vmatpush1.msra.mxu0 0.0
        %1050 = vmatprep.subr.mxu0 0.0
        %1051 = vmatpush1.msra.mxu0 0.0
        %1052 = vmatprep.subr.mxu0 0.0
        %1053 = vmatpush1.msra.mxu0 0.0
        %1054 = vmatprep.subr.mxu0 0.0
        %1055 = vmatpush1.msra.mxu0 0.0
        %1056 = vmatprep.subr.mxu0 0.0
        %1057 = vmatpush1.msra.mxu0 0.0
        %1058 = vmatprep.subr.mxu0 0.0
        %1059 = vmatpush1.msra.mxu0 0.0
        %1060 = vmatprep.subr.mxu0 0.0
        %1061 = vmatpush1.msra.mxu0 0.0
        %1062 = vmatprep.subr.mxu0 0.0
        %1063 = vmatpush1.msra.mxu0 0.0
        %1064 = vmatprep.subr.mxu0 0.0
        %1065 = vmatpush1.msra.mxu0 0.0
        %1066 = vmatprep.subr.mxu0 0.0
        %1067 = vmatpush1.msra.mxu0 0.0
        %1068 = vmatprep.subr.mxu0 0.0
        %1069 = vmatpush1.msra.mxu0 0.0
        %1070 = vmatprep.subr.mxu0 0.0
        %1071 = vmatpush1.msra.mxu0 0.0
        %1072 = vmatprep.mubr.f32.mxu0 0.0
        %1073 = vmatmul.mubr.f32.gmra.mrb[0].mxu0 %v1006
        %v1074 = vpop.f32.mrb[0].mxu0
        %v1075 = vadd.f32 0.0, %v1074
        %v1076 = vpop.f32.mrb[0].mxu0
        %1077 = vdwg.mxu0
        %1078 = vrot.lane.b32.xlu0 %v653, 32
        %v1079 = vpop.permute.xlu0 %1078
        %v1081 = vsel %vm841, %v734, %v653
        %v1082 = vsel %vm501, %v1081, %v1079
        %v1084 = vsel %vm844, %v1082, 0
        %1086 = vmatprep.subr.mxu0 0.0
        %1087 = vmatpush1.msra.mxu0 %v818
        %1088 = vmatprep.subr.mxu0 0.0
        %1089 = vmatpush1.msra.mxu0 %v819
        %1090 = vmatprep.subr.mxu0 0.0
        %1091 = vmatpush1.msra.mxu0 %v820
        %1092 = vmatprep.subr.mxu0 0.0
        %1093 = vmatpush1.msra.mxu0 %v821
        %1094 = vmatprep.subr.mxu0 0.0
        %1095 = vmatpush1.msra.mxu0 %v822
        %1096 = vmatprep.subr.mxu0 0.0
        %1097 = vmatpush1.msra.mxu0 %v823
        %1098 = vmatprep.subr.mxu0 0.0
        %1099 = vmatpush1.msra.mxu0 0.0
        %1100 = vmatprep.subr.mxu0 0.0
        %1101 = vmatpush1.msra.mxu0 0.0
        %1102 = vmatprep.subr.mxu0 0.0
        %1103 = vmatpush1.msra.mxu0 0.0
        %1104 = vmatprep.subr.mxu0 0.0
        %1105 = vmatpush1.msra.mxu0 0.0
        %1106 = vmatprep.subr.mxu0 0.0
        %1107 = vmatpush1.msra.mxu0 0.0
        %1108 = vmatprep.subr.mxu0 0.0
        %1109 = vmatpush1.msra.mxu0 0.0
        %1110 = vmatprep.subr.mxu0 0.0
        %1111 = vmatpush1.msra.mxu0 0.0
        %1112 = vmatprep.subr.mxu0 0.0
        %1113 = vmatpush1.msra.mxu0 0.0
        %1114 = vmatprep.subr.mxu0 0.0
        %1115 = vmatpush1.msra.mxu0 0.0
        %1116 = vmatprep.subr.mxu0 0.0
        %1117 = vmatpush1.msra.mxu0 0.0
        %1118 = vmatprep.subr.mxu0 0.0
        %1119 = vmatpush1.msra.mxu0 0.0
        %1120 = vmatprep.subr.mxu0 0.0
        %1121 = vmatpush1.msra.mxu0 0.0
        %1122 = vmatprep.subr.mxu0 0.0
        %1123 = vmatpush1.msra.mxu0 0.0
        %1124 = vmatprep.subr.mxu0 0.0
        %1125 = vmatpush1.msra.mxu0 0.0
        %1126 = vmatprep.subr.mxu0 0.0
        %1127 = vmatpush1.msra.mxu0 0.0
        %1128 = vmatprep.subr.mxu0 0.0
        %1129 = vmatpush1.msra.mxu0 0.0
        %1130 = vmatprep.subr.mxu0 0.0
        %1131 = vmatpush1.msra.mxu0 0.0
        %1132 = vmatprep.subr.mxu0 0.0
        %1133 = vmatpush1.msra.mxu0 0.0
        %1134 = vmatprep.subr.mxu0 0.0
        %1135 = vmatpush1.msra.mxu0 0.0
        %1136 = vmatprep.subr.mxu0 0.0
        %1137 = vmatpush1.msra.mxu0 0.0
        %1138 = vmatprep.subr.mxu0 0.0
        %1139 = vmatpush1.msra.mxu0 0.0
        %1140 = vmatprep.subr.mxu0 0.0
        %1141 = vmatpush1.msra.mxu0 0.0
        %1142 = vmatprep.subr.mxu0 0.0
        %1143 = vmatpush1.msra.mxu0 0.0
        %1144 = vmatprep.subr.mxu0 0.0
        %1145 = vmatpush1.msra.mxu0 0.0
        %1146 = vmatprep.subr.mxu0 0.0
        %1147 = vmatpush1.msra.mxu0 0.0
        %1148 = vmatprep.subr.mxu0 0.0
        %1149 = vmatpush1.msra.mxu0 0.0
        %1150 = vmatprep.mubr.f32.mxu0 0.0
        %1151 = vmatmul.mubr.f32.gmra.mrb[0].mxu0 %v1084
        %v1152 = vpop.f32.mrb[0].mxu0
        %v1153 = vadd.f32 0.0, %v1152
        %v1154 = vpop.f32.mrb[0].mxu0
        %1155 = vdwg.mxu0
        %1157 = vrot.lane.b32.xlu0 %v734, 112
        %v1158 = vpop.permute.xlu0 %1157
        %1160 = vrot.lane.b32.xlu0 %v734, 16
        %v1161 = vpop.permute.xlu0 %1160
        %v1163 = vsel %vm841, %v1158, %v1161
        %v1164 = vsel %vm501, %v1163, %v1001
        %v1166 = vsel %vm844, %v1164, 0
        %1168 = vmatprep.subr.mxu0 0.0
        %1169 = vmatpush1.msra.mxu0 %v818
        %1170 = vmatprep.subr.mxu0 0.0
        %1171 = vmatpush1.msra.mxu0 %v819
        %1172 = vmatprep.subr.mxu0 0.0
        %1173 = vmatpush1.msra.mxu0 %v820
        %1174 = vmatprep.subr.mxu0 0.0
        %1175 = vmatpush1.msra.mxu0 %v821
        %1176 = vmatprep.subr.mxu0 0.0
        %1177 = vmatpush1.msra.mxu0 %v822
        %1178 = vmatprep.subr.mxu0 0.0
        %1179 = vmatpush1.msra.mxu0 %v823
        %1180 = vmatprep.subr.mxu0 0.0
        %1181 = vmatpush1.msra.mxu0 0.0
        %1182 = vmatprep.subr.mxu0 0.0
        %1183 = vmatpush1.msra.mxu0 0.0
        %1184 = vmatprep.subr.mxu0 0.0
        %1185 = vmatpush1.msra.mxu0 0.0
        %1186 = vmatprep.subr.mxu0 0.0
        %1187 = vmatpush1.msra.mxu0 0.0
        %1188 = vmatprep.subr.mxu0 0.0
        %1189 = vmatpush1.msra.mxu0 0.0
        %1190 = vmatprep.subr.mxu0 0.0
        %1191 = vmatpush1.msra.mxu0 0.0
        %1192 = vmatprep.subr.mxu0 0.0
        %1193 = vmatpush1.msra.mxu0 0.0
        %1194 = vmatprep.subr.mxu0 0.0
        %1195 = vmatpush1.msra.mxu0 0.0
        %1196 = vmatprep.subr.mxu0 0.0
        %1197 = vmatpush1.msra.mxu0 0.0
        %1198 = vmatprep.subr.mxu0 0.0
        %1199 = vmatpush1.msra.mxu0 0.0
        %1200 = vmatprep.subr.mxu0 0.0
        %1201 = vmatpush1.msra.mxu0 0.0
        %1202 = vmatprep.subr.mxu0 0.0
        %1203 = vmatpush1.msra.mxu0 0.0
        %1204 = vmatprep.subr.mxu0 0.0
        %1205 = vmatpush1.msra.mxu0 0.0
        %1206 = vmatprep.subr.mxu0 0.0
        %1207 = vmatpush1.msra.mxu0 0.0
        %1208 = vmatprep.subr.mxu0 0.0
        %1209 = vmatpush1.msra.mxu0 0.0
        %1210 = vmatprep.subr.mxu0 0.0
        %1211 = vmatpush1.msra.mxu0 0.0
        %1212 = vmatprep.subr.mxu0 0.0
        %1213 = vmatpush1.msra.mxu0 0.0
        %1214 = vmatprep.subr.mxu0 0.0
        %1215 = vmatpush1.msra.mxu0 0.0
        %1216 = vmatprep.subr.mxu0 0.0
        %1217 = vmatpush1.msra.mxu0 0.0
        %1218 = vmatprep.subr.mxu0 0.0
        %1219 = vmatpush1.msra.mxu0 0.0
        %1220 = vmatprep.subr.mxu0 0.0
        %1221 = vmatpush1.msra.mxu0 0.0
        %1222 = vmatprep.subr.mxu0 0.0
        %1223 = vmatpush1.msra.mxu0 0.0
        %1224 = vmatprep.subr.mxu0 0.0
        %1225 = vmatpush1.msra.mxu0 0.0
        %1226 = vmatprep.subr.mxu0 0.0
        %1227 = vmatpush1.msra.mxu0 0.0
        %1228 = vmatprep.subr.mxu0 0.0
        %1229 = vmatpush1.msra.mxu0 0.0
        %1230 = vmatprep.subr.mxu0 0.0
        %1231 = vmatpush1.msra.mxu0 0.0
        %1232 = vmatprep.mubr.f32.mxu0 0.0
        %1233 = vmatmul.mubr.f32.gmra.mrb[0].mxu0 %v1166
        %v1234 = vpop.f32.mrb[0].mxu0
        %v1235 = vadd.f32 0.0, %v1234
        %v1236 = vpop.f32.mrb[0].mxu0
        %1237 = vdwg.mxu0
        %1238 = vrot.lane.b32.xlu0 %v734, 32
        %v1239 = vpop.permute.xlu0 %1238
        %v1241 = vsel %vm841, %v815, %v734
        %v1242 = vsel %vm501, %v1241, %v1239
        %v1244 = vsel %vm844, %v1242, 0
        %1246 = vmatprep.subr.mxu0 0.0
        %1247 = vmatpush1.msra.mxu0 %v818
        %1248 = vmatprep.subr.mxu0 0.0
        %1249 = vmatpush1.msra.mxu0 %v819
        %1250 = vmatprep.subr.mxu0 0.0
        %1251 = vmatpush1.msra.mxu0 %v820
        %1252 = vmatprep.subr.mxu0 0.0
        %1253 = vmatpush1.msra.mxu0 %v821
        %1254 = vmatprep.subr.mxu0 0.0
        %1255 = vmatpush1.msra.mxu0 %v822
        %1256 = vmatprep.subr.mxu0 0.0
        %1257 = vmatpush1.msra.mxu0 %v823
        %1258 = vmatprep.subr.mxu0 0.0
        %1259 = vmatpush1.msra.mxu0 0.0
        %1260 = vmatprep.subr.mxu0 0.0
        %1261 = vmatpush1.msra.mxu0 0.0
        %1262 = vmatprep.subr.mxu0 0.0
        %1263 = vmatpush1.msra.mxu0 0.0
        %1264 = vmatprep.subr.mxu0 0.0
        %1265 = vmatpush1.msra.mxu0 0.0
        %1266 = vmatprep.subr.mxu0 0.0
        %1267 = vmatpush1.msra.mxu0 0.0
        %1268 = vmatprep.subr.mxu0 0.0
        %1269 = vmatpush1.msra.mxu0 0.0
        %1270 = vmatprep.subr.mxu0 0.0
        %1271 = vmatpush1.msra.mxu0 0.0
        %1272 = vmatprep.subr.mxu0 0.0
        %1273 = vmatpush1.msra.mxu0 0.0
        %1274 = vmatprep.subr.mxu0 0.0
        %1275 = vmatpush1.msra.mxu0 0.0
        %1276 = vmatprep.subr.mxu0 0.0
        %1277 = vmatpush1.msra.mxu0 0.0
        %1278 = vmatprep.subr.mxu0 0.0
        %1279 = vmatpush1.msra.mxu0 0.0
        %1280 = vmatprep.subr.mxu0 0.0
        %1281 = vmatpush1.msra.mxu0 0.0
        %1282 = vmatprep.subr.mxu0 0.0
        %1283 = vmatpush1.msra.mxu0 0.0
        %1284 = vmatprep.subr.mxu0 0.0
        %1285 = vmatpush1.msra.mxu0 0.0
        %1286 = vmatprep.subr.mxu0 0.0
        %1287 = vmatpush1.msra.mxu0 0.0
        %1288 = vmatprep.subr.mxu0 0.0
        %1289 = vmatpush1.msra.mxu0 0.0
        %1290 = vmatprep.subr.mxu0 0.0
        %1291 = vmatpush1.msra.mxu0 0.0
        %1292 = vmatprep.subr.mxu0 0.0
        %1293 = vmatpush1.msra.mxu0 0.0
        %1294 = vmatprep.subr.mxu0 0.0
        %1295 = vmatpush1.msra.mxu0 0.0
        %1296 = vmatprep.subr.mxu0 0.0
        %1297 = vmatpush1.msra.mxu0 0.0
        %1298 = vmatprep.subr.mxu0 0.0
        %1299 = vmatpush1.msra.mxu0 0.0
        %1300 = vmatprep.subr.mxu0 0.0
        %1301 = vmatpush1.msra.mxu0 0.0
        %1302 = vmatprep.subr.mxu0 0.0
        %1303 = vmatpush1.msra.mxu0 0.0
        %1304 = vmatprep.subr.mxu0 0.0
        %1305 = vmatpush1.msra.mxu0 0.0
        %1306 = vmatprep.subr.mxu0 0.0
        %1307 = vmatpush1.msra.mxu0 0.0
        %1308 = vmatprep.subr.mxu0 0.0
        %1309 = vmatpush1.msra.mxu0 0.0
        %1310 = vmatprep.mubr.f32.mxu0 0.0
        %1311 = vmatmul.mubr.f32.gmra.mrb[0].mxu0 %v1244
        %v1312 = vpop.f32.mrb[0].mxu0
        %v1313 = vadd.f32 0.0, %v1312
        %v1314 = vpop.f32.mrb[0].mxu0
        %1315 = vdwg.mxu0
        %1316 = vrot.lane.b32.xlu0 %v815, 112
        %v1317 = vpop.permute.xlu0 %1316
        %1319 = vrot.lane.b32.xlu0 %v815, 16
        %v1320 = vpop.permute.xlu0 %1319
        %v1322 = vsel %vm841, %v1317, %v1320
        %v1323 = vsel %vm501, %v1322, %v1161
        %v1325 = vsel %vm844, %v1323, 0
        %1327 = vmatprep.subr.mxu0 0.0
        %1328 = vmatpush1.msra.mxu0 %v818
        %1329 = vmatprep.subr.mxu0 0.0
        %1330 = vmatpush1.msra.mxu0 %v819
        %1331 = vmatprep.subr.mxu0 0.0
        %1332 = vmatpush1.msra.mxu0 %v820
        %1333 = vmatprep.subr.mxu0 0.0
        %1334 = vmatpush1.msra.mxu0 %v821
        %1335 = vmatprep.subr.mxu0 0.0
        %1336 = vmatpush1.msra.mxu0 %v822
        %1337 = vmatprep.subr.mxu0 0.0
        %1338 = vmatpush1.msra.mxu0 %v823
        %1339 = vmatprep.subr.mxu0 0.0
        %1340 = vmatpush1.msra.mxu0 0.0
        %1341 = vmatprep.subr.mxu0 0.0
        %1342 = vmatpush1.msra.mxu0 0.0
        %1343 = vmatprep.subr.mxu0 0.0
        %1344 = vmatpush1.msra.mxu0 0.0
        %1345 = vmatprep.subr.mxu0 0.0
        %1346 = vmatpush1.msra.mxu0 0.0
        %1347 = vmatprep.subr.mxu0 0.0
        %1348 = vmatpush1.msra.mxu0 0.0
        %1349 = vmatprep.subr.mxu0 0.0
        %1350 = vmatpush1.msra.mxu0 0.0
        %1351 = vmatprep.subr.mxu0 0.0
        %1352 = vmatpush1.msra.mxu0 0.0
        %1353 = vmatprep.subr.mxu0 0.0
        %1354 = vmatpush1.msra.mxu0 0.0
        %1355 = vmatprep.subr.mxu0 0.0
        %1356 = vmatpush1.msra.mxu0 0.0
        %1357 = vmatprep.subr.mxu0 0.0
        %1358 = vmatpush1.msra.mxu0 0.0
        %1359 = vmatprep.subr.mxu0 0.0
        %1360 = vmatpush1.msra.mxu0 0.0
        %1361 = vmatprep.subr.mxu0 0.0
        %1362 = vmatpush1.msra.mxu0 0.0
        %1363 = vmatprep.subr.mxu0 0.0
        %1364 = vmatpush1.msra.mxu0 0.0
        %1365 = vmatprep.subr.mxu0 0.0
        %1366 = vmatpush1.msra.mxu0 0.0
        %1367 = vmatprep.subr.mxu0 0.0
        %1368 = vmatpush1.msra.mxu0 0.0
        %1369 = vmatprep.subr.mxu0 0.0
        %1370 = vmatpush1.msra.mxu0 0.0
        %1371 = vmatprep.subr.mxu0 0.0
        %1372 = vmatpush1.msra.mxu0 0.0
        %1373 = vmatprep.subr.mxu0 0.0
        %1374 = vmatpush1.msra.mxu0 0.0
        %1375 = vmatprep.subr.mxu0 0.0
        %1376 = vmatpush1.msra.mxu0 0.0
        %1377 = vmatprep.subr.mxu0 0.0
        %1378 = vmatpush1.msra.mxu0 0.0
        %1379 = vmatprep.subr.mxu0 0.0
        %1380 = vmatpush1.msra.mxu0 0.0
        %1381 = vmatprep.subr.mxu0 0.0
        %1382 = vmatpush1.msra.mxu0 0.0
        %1383 = vmatprep.subr.mxu0 0.0
        %1384 = vmatpush1.msra.mxu0 0.0
        %1385 = vmatprep.subr.mxu0 0.0
        %1386 = vmatpush1.msra.mxu0 0.0
        %1387 = vmatprep.subr.mxu0 0.0
        %1388 = vmatpush1.msra.mxu0 0.0
        %1389 = vmatprep.subr.mxu0 0.0
        %1390 = vmatpush1.msra.mxu0 0.0
        %1391 = vmatprep.mubr.f32.mxu0 0.0
        %1392 = vmatmul.mubr.f32.gmra.mrb[0].mxu0 %v1325
        %v1393 = vpop.f32.mrb[0].mxu0
        %v1394 = vadd.f32 0.0, %v1393
        %v1395 = vpop.f32.mrb[0].mxu0
        %1396 = vdwg.mxu0
        %v1397 = vrot.slane %v575, 1
        %v1399 = vsel %vm256, %v1397, 0.0
        %1400 = vrot.lane.b32.xlu0 %v815, 32
        %v1401 = vpop.permute.xlu0 %1400
        %v1403 = vsel %vm841, %v1399, %v815
        %v1404 = vsel %vm501, %v1403, %v1401
        %v1406 = vsel %vm844, %v1404, 0
        %1408 = vmatprep.subr.mxu0 0.0
        %1409 = vmatpush1.msra.mxu0 %v818
        %1410 = vmatprep.subr.mxu0 0.0
        %1411 = vmatpush1.msra.mxu0 %v819
        %1412 = vmatprep.subr.mxu0 0.0
        %1413 = vmatpush1.msra.mxu0 %v820
        %1414 = vmatprep.subr.mxu0 0.0
        %1415 = vmatpush1.msra.mxu0 %v821
        %1416 = vmatprep.subr.mxu0 0.0
        %1417 = vmatpush1.msra.mxu0 %v822
        %1418 = vmatprep.subr.mxu0 0.0
        %1419 = vmatpush1.msra.mxu0 %v823
        %1420 = vmatprep.subr.mxu0 0.0
        %1421 = vmatpush1.msra.mxu0 0.0
        %1422 = vmatprep.subr.mxu0 0.0
        %1423 = vmatpush1.msra.mxu0 0.0
        %1424 = vmatprep.subr.mxu0 0.0
        %1425 = vmatpush1.msra.mxu0 0.0
        %1426 = vmatprep.subr.mxu0 0.0
        %1427 = vmatpush1.msra.mxu0 0.0
        %1428 = vmatprep.subr.mxu0 0.0
        %1429 = vmatpush1.msra.mxu0 0.0
        %1430 = vmatprep.subr.mxu0 0.0
        %1431 = vmatpush1.msra.mxu0 0.0
        %1432 = vmatprep.subr.mxu0 0.0
        %1433 = vmatpush1.msra.mxu0 0.0
        %1434 = vmatprep.subr.mxu0 0.0
        %1435 = vmatpush1.msra.mxu0 0.0
        %1436 = vmatprep.subr.mxu0 0.0
        %1437 = vmatpush1.msra.mxu0 0.0
        %1438 = vmatprep.subr.mxu0 0.0
        %1439 = vmatpush1.msra.mxu0 0.0
        %1440 = vmatprep.subr.mxu0 0.0
        %1441 = vmatpush1.msra.mxu0 0.0
        %1442 = vmatprep.subr.mxu0 0.0
        %1443 = vmatpush1.msra.mxu0 0.0
        %1444 = vmatprep.subr.mxu0 0.0
        %1445 = vmatpush1.msra.mxu0 0.0
        %1446 = vmatprep.subr.mxu0 0.0
        %1447 = vmatpush1.msra.mxu0 0.0
        %1448 = vmatprep.subr.mxu0 0.0
        %1449 = vmatpush1.msra.mxu0 0.0
        %1450 = vmatprep.subr.mxu0 0.0
        %1451 = vmatpush1.msra.mxu0 0.0
        %1452 = vmatprep.subr.mxu0 0.0
        %1453 = vmatpush1.msra.mxu0 0.0
        %1454 = vmatprep.subr.mxu0 0.0
        %1455 = vmatpush1.msra.mxu0 0.0
        %1456 = vmatprep.subr.mxu0 0.0
        %1457 = vmatpush1.msra.mxu0 0.0
        %1458 = vmatprep.subr.mxu0 0.0
        %1459 = vmatpush1.msra.mxu0 0.0
        %1460 = vmatprep.subr.mxu0 0.0
        %1461 = vmatpush1.msra.mxu0 0.0
        %1462 = vmatprep.subr.mxu0 0.0
        %1463 = vmatpush1.msra.mxu0 0.0
        %1464 = vmatprep.subr.mxu0 0.0
        %1465 = vmatpush1.msra.mxu0 0.0
        %1466 = vmatprep.subr.mxu0 0.0
        %1467 = vmatpush1.msra.mxu0 0.0
        %1468 = vmatprep.subr.mxu0 0.0
        %1469 = vmatpush1.msra.mxu0 0.0
        %1470 = vmatprep.subr.mxu0 0.0
        %1471 = vmatpush1.msra.mxu0 0.0
        %1472 = vmatprep.mubr.f32.mxu0 0.0
        %1473 = vmatmul.mubr.f32.gmra.mrb[0].mxu0 %v1406
        %v1474 = vpop.f32.mrb[0].mxu0
        %v1475 = vadd.f32 0.0, %v1474
        %v1476 = vpop.f32.mrb[0].mxu0
        %1477 = vdwg.mxu0
        %1479 = vrot.lane.b32.xlu0 %v993, 16
        %v1480 = vpop.permute.xlu0 %1479
        %1483 = vrot.lane.b32.xlu0 %v1075, 32
        %v1484 = vpop.permute.xlu0 %1483
        %1487 = vrot.lane.b32.xlu0 %v1153, 48
        %v1488 = vpop.permute.xlu0 %1487
        %1491 = vrot.lane.b32.xlu0 %v1235, 64
        %v1492 = vpop.permute.xlu0 %1491
        %1495 = vrot.lane.b32.xlu0 %v1313, 80
        %v1496 = vpop.permute.xlu0 %1495
        %1499 = vrot.lane.b32.xlu0 %v1394, 96
        %v1500 = vpop.permute.xlu0 %1499
        %1503 = vrot.lane.b32.xlu0 %v1475, 112
        %v1504 = vpop.permute.xlu0 %1503
        %v1506 = vsel %vm841, %v915, %v1480
        %vm1507 = vcmask 195584
        %v1508 = vsel %vm1507, %v1506, %v1480
        %v1509 = vsel %vm501, %v1508, %v1484
        %vm1510 = vcmask 326656
        %v1511 = vsel %vm1510, %v1509, %v1484
        %v1512 = vsel %vm844, %v1511, %v1488
        %vm1513 = vcmask 457728
        %v1514 = vsel %vm1513, %v1512, %v1488
        %v1515 = vsel %vm322, %v1514, %v1492
        %vm1516 = vcmask 588800
        %v1517 = vsel %vm1516, %v1515, %v1492
        %vm1518 = vcmask 654336
        %v1519 = vsel %vm1518, %v1517, %v1496
        %vm1520 = vcmask 719872
        %v1521 = vsel %vm1520, %v1519, %v1496
        %v1522 = vsel %vm504, %v1521, %v1500
        %vm1523 = vcmask 850944
        %v1524 = vsel %vm1523, %v1522, %v1500
        %vm1525 = vcmask 916480
        %v1526 = vsel %vm1525, %v1524, %v1504
        %vm1527 = vcmask 982016
        %v1528 = vsel %vm1527, %v1526, %v1504
        %v1529 = vld [vmem:[%s5] sm:$0xff]
        %v1530 = vld [vmem:[%s5 + $0x8] sm:$0xff]
        %v1531 = vld [vmem:[%s5 + $0x10] sm:$0xff]
        %v1532 = vld [vmem:[%s5 + $0x18] sm:$0xff]
        %v1533 = vld [vmem:[%s5 + $0x20] sm:$0xff]
        %v1534 = vld [vmem:[%s5 + $0x28] sm:$0xff]
        %v1535 = vld [vmem:[%s5 + $0x30] sm:$0xff]
        %v1536 = vld [vmem:[%s5 + $0x38] sm:$0xff]
        %v1537 = vld [vmem:[%s5 + $0x40] sm:$0xff]
        %v1538 = vld [vmem:[%s5 + $0x48] sm:$0xff]
        %v1539 = vld [vmem:[%s5 + $0x50] sm:$0xff]
        %v1540 = vld [vmem:[%s5 + $0x58] sm:$0xff]
        %v1541 = vld [vmem:[%s5 + $0x60] sm:$0xff]
        %v1542 = vld [vmem:[%s5 + $0x68] sm:$0xff]
        %v1543 = vld [vmem:[%s5 + $0x70] sm:$0xff]
        %v1544 = vld [vmem:[%s5 + $0x78] sm:$0xff]
        %v1545 = vld [vmem:[%s5 + $0x80] sm:$0xff]
        %v1546 = vld [vmem:[%s5 + $0x88] sm:$0xff]
        %v1547 = vld [vmem:[%s5 + $0x90] sm:$0xff]
        %v1548 = vld [vmem:[%s5 + $0x98] sm:$0xff]
        %v1549 = vld [vmem:[%s5 + $0xa0] sm:$0xff]
        %v1550 = vld [vmem:[%s5 + $0xa8] sm:$0xff]
        %v1551 = vld [vmem:[%s5 + $0xb0] sm:$0xff]
        %v1552 = vld [vmem:[%s5 + $0xb8] sm:$0xff]
        %v1553 = vld [vmem:[%s5 + $0xc0] sm:$0xff]
        %v1554 = vld [vmem:[%s5 + $0xc8] sm:$0xff]
        %v1555 = vld [vmem:[%s5 + $0xd0] sm:$0xff]
        %v1556 = vld [vmem:[%s5 + $0xd8] sm:$0xff]
        %v1557 = vld [vmem:[%s5 + $0xe0] sm:$0xff]
        %v1558 = vld [vmem:[%s5 + $0xe8] sm:$0xff]
        %v1559 = vld [vmem:[%s5 + $0xf0] sm:$0xff]
        %v1560 = vld [vmem:[%s5 + $0xf8] sm:$0xff]
        %1561 = vmatprep.subr.mxu0 %v1530
        %1562 = vmatpush1.msra.mxu0 %v1529
        %1563 = vmatprep.subr.mxu0 %v1532
        %1564 = vmatpush1.msra.mxu0 %v1531
        %1565 = vmatprep.subr.mxu0 %v1534
        %1566 = vmatpush1.msra.mxu0 %v1533
        %1567 = vmatprep.subr.mxu0 %v1536
        %1568 = vmatpush1.msra.mxu0 %v1535
        %1569 = vmatprep.subr.mxu0 %v1538
        %1570 = vmatpush1.msra.mxu0 %v1537
        %1571 = vmatprep.subr.mxu0 %v1540
        %1572 = vmatpush1.msra.mxu0 %v1539
        %1573 = vmatprep.subr.mxu0 %v1542
        %1574 = vmatpush1.msra.mxu0 %v1541
        %1575 = vmatprep.subr.mxu0 %v1544
        %1576 = vmatpush1.msra.mxu0 %v1543
        %1577 = vmatprep.subr.mxu0 %v1546
        %1578 = vmatpush1.msra.mxu0 %v1545
        %1579 = vmatprep.subr.mxu0 %v1548
        %1580 = vmatpush1.msra.mxu0 %v1547
        %1581 = vmatprep.subr.mxu0 %v1550
        %1582 = vmatpush1.msra.mxu0 %v1549
        %1583 = vmatprep.subr.mxu0 %v1552
        %1584 = vmatpush1.msra.mxu0 %v1551
        %1585 = vmatprep.subr.mxu0 %v1554
        %1586 = vmatpush1.msra.mxu0 %v1553
        %1587 = vmatprep.subr.mxu0 %v1556
        %1588 = vmatpush1.msra.mxu0 %v1555
        %1589 = vmatprep.subr.mxu0 %v1558
        %1590 = vmatpush1.msra.mxu0 %v1557
        %1591 = vmatprep.subr.mxu0 %v1560
        %1592 = vmatpush1.msra.mxu0 %v1559
        %1593 = vmatprep.subr.mxu0 0.0
        %1594 = vmatpush1.msra.mxu0 0.0
        %1595 = vmatprep.subr.mxu0 0.0
        %1596 = vmatpush1.msra.mxu0 0.0
        %1597 = vmatprep.subr.mxu0 0.0
        %1598 = vmatpush1.msra.mxu0 0.0
        %1599 = vmatprep.subr.mxu0 0.0
        %1600 = vmatpush1.msra.mxu0 0.0
        %1601 = vmatprep.subr.mxu0 0.0
        %1602 = vmatpush1.msra.mxu0 0.0
        %1603 = vmatprep.subr.mxu0 0.0
        %1604 = vmatpush1.msra.mxu0 0.0
        %1605 = vmatprep.subr.mxu0 0.0
        %1606 = vmatpush1.msra.mxu0 0.0
        %1607 = vmatprep.subr.mxu0 0.0
        %1608 = vmatpush1.msra.mxu0 0.0
        %1609 = vmatprep.subr.mxu0 0.0
        %1610 = vmatpush1.msra.mxu0 0.0
        %1611 = vmatprep.subr.mxu0 0.0
        %1612 = vmatpush1.msra.mxu0 0.0
        %1613 = vmatprep.subr.mxu0 0.0
        %1614 = vmatpush1.msra.mxu0 0.0
        %1615 = vmatprep.subr.mxu0 0.0
        %1616 = vmatpush1.msra.mxu0 0.0
        %1617 = vmatprep.subr.mxu0 0.0
        %1618 = vmatpush1.msra.mxu0 0.0
        %1619 = vmatprep.subr.mxu0 0.0
        %1620 = vmatpush1.msra.mxu0 0.0
        %1621 = vmatprep.subr.mxu0 0.0
        %1622 = vmatpush1.msra.mxu0 0.0
        %1623 = vmatprep.subr.mxu0 0.0
        %1624 = vmatpush1.msra.mxu0 0.0
        %1625 = vmatprep.mubr.f32.mxu0 0.0
        %1626 = vmatmul.mubr.f32.gmra.mrb[0].mxu0 %v1528
        %v1627 = vpop.f32.mrb[0].mxu0
        %v1628 = vadd.f32 0.0, %v1627
        %v1629 = vpop.f32.mrb[0].mxu0
        %v1630 = vadd.f32 0.0, %v1629
        %1631 = vdwg.mxu0
        %v1632 = vsel %vm501, %v1630, 0.0
        %v1635 = vrot.slane %v1628, 1
        %v1636 = vrot.slane %v1630, 1
        %1637 = vrot.lane.b32.xlu0 %v1635, 16
        %v1638 = vpop.permute.xlu0 %1637
        %1639 = vrot.lane.b32.xlu0 %v1636, 16
        %v1640 = vpop.permute.xlu0 %1639
        %v1641 = vsel %vm841, %v1638, %v1640
        %v1644 = vsel %vm841, 0.0, %v1638
        %v1645 = vsel %vm844, %v1641, 0.0
        %v1646 = vadd.f32 %v1628, %v1644
        %v1647 = vadd.f32 %v1632, %v1645
        %v1648 = vrot.slane %v1628, 2
        %v1649 = vrot.slane %v1630, 2
        %1650 = vrot.lane.b32.xlu0 %v1648, 32
        %v1651 = vpop.permute.xlu0 %1650
        %1652 = vrot.lane.b32.xlu0 %v1649, 32
        %v1653 = vpop.permute.xlu0 %1652
        %v1654 = vsel %vm501, %v1651, %v1653
        %v1657 = vsel %vm501, 0.0, %v1651
        %v1658 = vsel %vm322, %v1654, 0.0
        %v1659 = vadd.f32 %v1646, %v1657
        %v1660 = vadd.f32 %v1647, %v1658
        %v1661 = vrot.slane %v1628, 3
        %v1662 = vrot.slane %v1630, 3
        %1663 = vrot.lane.b32.xlu0 %v1661, 48
        %v1664 = vpop.permute.xlu0 %1663
        %1665 = vrot.lane.b32.xlu0 %v1662, 48
        %v1666 = vpop.permute.xlu0 %1665
        %v1667 = vsel %vm844, %v1664, %v1666
        %v1670 = vsel %vm844, 0.0, %v1664
        %v1671 = vsel %vm1518, %v1667, 0.0
        %v1672 = vadd.f32 %v1659, %v1670
        %v1673 = vadd.f32 %v1660, %v1671
        %v1674 = vrot.slane %v1628, 4
        %v1675 = vrot.slane %v1630, 4
        %1676 = vrot.lane.b32.xlu0 %v1674, 64
        %v1677 = vpop.permute.xlu0 %1676
        %1678 = vrot.lane.b32.xlu0 %v1675, 64
        %v1679 = vpop.permute.xlu0 %1678
        %v1680 = vsel %vm322, %v1677, %v1679
        %v1683 = vsel %vm322, 0.0, %v1677
        %v1684 = vsel %vm504, %v1680, 0.0
        %v1685 = vadd.f32 %v1672, %v1683
        %v1686 = vadd.f32 %v1673, %v1684
        %v1687 = vrot.slane %v1628, 5
        %v1688 = vrot.slane %v1630, 5
        %1689 = vrot.lane.b32.xlu0 %v1687, 80
        %v1690 = vpop.permute.xlu0 %1689
        %1691 = vrot.lane.b32.xlu0 %v1688, 80
        %v1692 = vpop.permute.xlu0 %1691
        %v1693 = vsel %vm1518, %v1690, %v1692
        %v1696 = vsel %vm1518, 0.0, %v1690
        %v1697 = vsel %vm1525, %v1693, 0.0
        %v1698 = vadd.f32 %v1685, %v1696
        %v1699 = vadd.f32 %v1686, %v1697
        %v1700 = vrot.slane %v1628, 6
        %v1701 = vrot.slane %v1630, 6
        %1702 = vrot.lane.b32.xlu0 %v1700, 96
        %v1703 = vpop.permute.xlu0 %1702
        %1704 = vrot.lane.b32.xlu0 %v1701, 96
        %v1705 = vpop.permute.xlu0 %1704
        %v1706 = vsel %vm504, %v1703, %v1705
        %v1709 = vsel %vm504, 0.0, %v1703
        %v1710 = vadd.f32 %v1698, %v1709
        %v1711 = vadd.f32 %v1699, %v1706
        %v1712 = vrot.slane %v1628, 7
        %v1713 = vrot.slane %v1630, 7
        %1714 = vrot.lane.b32.xlu0 %v1712, 112
        %v1715 = vpop.permute.xlu0 %1714
        %1716 = vrot.lane.b32.xlu0 %v1713, 112
        %v1717 = vpop.permute.xlu0 %1716
        %v1718 = vsel %vm1525, %v1715, %v1717
        %v1722 = vsel %vm1525, 0.0, %v1715
        %v1723 = vadd.f32 %v1710, %v1722
        %v1724 = vadd.f32 %v1711, %v1718
        %v1725 = vadd.f32 %v1717, 0.0
        %v1729 = vcombine.low %v1723, %v1724
        %v1731 = vunpack.c.l.s4 1966171168
        %v1732 = vunpack.c.0.s8 %v1731
        %v1733 = vlaneseq
        %v1734 = vshrl.u32 %v1733, 7
        %v1735 = vsub.s32 %v1732, %v1734
        %v1736 = vrot.slane %v1729, %v1735
        %v1738 = vunpack.c.l.s4 1966171168
        %v1739 = vunpack.c.0.s8 %v1738
        %v1740 = vlaneseq
        %v1741 = vshrl.u32 %v1740, 7
        %v1742 = vsub.s32 %v1739, %v1741
        %v1743 = vrot.slane %v1725, %v1742
        %v1744 = vcombine.low %v1736, %v1743
        %v1746 = vunpack.c.l.s4 1966171168
        %v1747 = vunpack.c.0.s8 %v1746
        %v1748 = vlaneseq
        %v1749 = vshrl.u32 %v1748, 7
        %v1750 = vsub.s32 %v1747, %v1749
        %v1751 = vrot.slane %v1744, %v1750
        %v1753 = vlaneseq
        %vm1754 = vcmp.ge.s32.totalorder %v1753, 0
        %vm1755 = vcmp.lt.s32.totalorder %v1753, 272
        %vm1756 = vmand %vm1754, %vm1755
        %1757 = vst.msk [vmem:[%s242] sm:$0x7] %vm1756, %v1751
        %s1758 = sand.u32 %s159, 1
        %s1759 = scalar_lea.sflag [#allocation3], %s1758
        %s1760 = sand.u32 %s159, 1
        %s1761 = smul.addr %s1760, 3
        %s1762 = scalar_lea.vmem [#allocation2], %s1761
        // Predicated region
        $region45: #{tpu_custom_call.1} parent=43 // pred_check
          %p1763 = pneg %p169
        $region46: #{tpu_custom_call.1} parent=43 // pred_check_branch
          %1765 = sbr.rel (%p1763) target = $region48
        $region47: #{tpu_custom_call.1} parent=43 // pred_region
          %s1767 = ssub.s32 48, 48
          %1768 = vsyncadd %s1759, %s1767
          %s1769 = smul.addr %s20, 3
          %s1770 = smul.addr %s1769, 16
          %s1771 = scalar_lea.hbm %s6, %s1770
          %s1773 = sshll.u32 %s1762, 4
          %s1774 = int_to_ptr.vmem [resolvable:$true] %s1773
          %1776 = dma.vmem_to_hbm [thread:$0]  %s1774, 48, %s1771, %s1759
        $region48: #{tpu_custom_call.1} parent=43 // pred_fallthru
          _
      $region44: #{tpu_custom_call.1} parent=5 // pred_fallthru
        _
      %p1777 = scmp.le.s32.totalorder 2, %s15
      // Predicated region
      $region49: #{tpu_custom_call.1} parent=5 // pred_check
        %p1778 = pneg %p1777
      $region50: #{tpu_custom_call.1} parent=5 // pred_check_branch
        %1780 = sbr.rel (%p1778) target = $region52
      $region51: #{tpu_custom_call.1} parent=5 // pred_region
        %s1781 = ssub.s32 %s15, 2
        // Predicated region
        $region53: #{tpu_custom_call.1} parent=51 // pred_check
          %p1782 = pneg %p175
        $region54: #{tpu_custom_call.1} parent=51 // pred_check_branch
          %1784 = sbr.rel (%p1782) target = $region56
        $region55: #{tpu_custom_call.1} parent=51 // pred_region
          %s1785 = sand.u32 %s160, 1
          %s1786 = scalar_lea.sflag [#allocation3], %s1785
          %s1787 = sand.u32 %s160, 1
          %s1788 = smul.addr %s1787, 3
          %s1789 = scalar_lea.vmem [#allocation2], %s1788
          %1790 = dma.done %s1786, 48
        $region56: #{tpu_custom_call.1} parent=51 // pred_fallthru
          _
      $region52: #{tpu_custom_call.1} parent=5 // pred_fallthru
        _
    $region6: #{tpu_custom_call.1} parent=1 // loop_footer
      %s19 = sadd.s32 1, %s15
    $region7: #{tpu_custom_call.1} parent=1 // loop_footer_branch
      %14 = sbr.rel target = $region3
    $region8: #{tpu_custom_call.1} parent=1 // loop_exit
      _
    %1791 = vsyncpa [#allocation3], 1
    %s1792 = scalar_lea.sflag [#allocation3], 1
    %1793 = vsyncpa %s1792, 1

</llo_original>
